<compile_context>
chip_gen: v7x
topology: tpu7x:2x2x1
jax: 0.10.0
libtpu: 0.0.40
codegen_flags: <defaults>
</compile_context>

<pallas_src>
import functools

import jax
import jax.numpy as jnp
from jax.experimental import pallas as pl
from jax.experimental.pallas import tpu as pltpu

# Python-float sentinel for the masked neighbourhood max (must NOT be a jnp scalar:
# that would be captured as a constant by the kernel and rejected by pallas_call).
_NEG_INF = -1e30


def _full_specs(*shapes):
    """BlockSpecs covering each full array (grid=(1,); small VMEM-resident operands)."""
    specs = []
    for s in shapes:
        nd = len(s)
        specs.append(pl.BlockSpec(s, lambda i, _nd=nd: (0,) * _nd))
    return specs


# --------------------------------------------------------------------------- #
# Fused forward kernel: L x (EdgeConv + ReLU)  ->  pairwise edge regression.
#   EdgeConv:  out[i] = relu( max_{j in N(i)} T[j]  - T[i] + Ph[i] + (btheta+bphi) )
#              with T = X @ Wtheta^T, Ph = X @ Wphi^T (max distributes over j-constants).
#   Regressor: pred[n, m] = W2 . relu( W1 trk[m] - W1 det[n] + b1 ) + b2
# --------------------------------------------------------------------------- #
def _fused_edge_conv_kernel(x_ref, adj_ref, wt_ref, wp_ref, bsum_ref,
                            w1t_ref, b1_ref, w2_ref, b2_ref, out_ref,
                            *, n_det, n_trk, tile_j):
    P, F = x_ref.shape
    L = wt_ref.shape[0]
    m_pad = out_ref.shape[1]

    x = x_ref[...]                                                     # (P, F) f32, VMEM-resident
    # Additive neighbourhood mask: computed ONCE, reused by every layer (adj loaded once).
    bias = jnp.where(adj_ref[...] > 0.0, 0.0, _NEG_INF)               # (P, P) f32

    for l in range(L):                                                 # static unroll over layers
        xb = x.astype(jnp.bfloat16)                                    # bf16 MXU operands
        t = jnp.dot(xb, wt_ref[l], preferred_element_type=jnp.float32)   # (P, F) f32 accum
        ph = jnp.dot(xb, wp_ref[l], preferred_element_type=jnp.float32)  # (P, F)
        # j-tiled running max: peak live slab is (P, tile_j, F) instead of (P, P, F).
        nmax = jnp.full((P, F), _NEG_INF, jnp.float32)
        for j0 in range(0, P, tile_j):                                 # static loop (1 tile at toy P)
            tj = t[j0:j0 + tile_j]                                     # (tj, F)
            bj = bias[:, j0:j0 + tile_j]                               # (P, tj)
            nmax = jnp.maximum(nmax, jnp.max(tj[None, :, :] + bj[:, :, None], axis=1))
        # EdgeConv + fused ReLU.
        x = jnp.maximum(nmax - t + ph + bsum_ref[l], 0.0)              # (P, F)

    # ---------------- edge regression on the final embeddings ----------------
    det = x[:n_det]                                                    # (N, F)
    trk = x[n_det:n_det + n_trk]                                       # (M, F)
    a = jnp.dot(trk.astype(jnp.bfloat16), w1t_ref[...],
                preferred_element_type=jnp.float32)                    # (M, H)
    b = jnp.dot(det.astype(jnp.bfloat16), w1t_ref[...],
                preferred_element_type=jnp.float32)                    # (N, H)
    h = jnp.maximum(a[None, :, :] - b[:, None, :] + b1_ref[...][None, :, :], 0.0)  # (N, M, H)
    # TODO(synk): for production-size N, M tile over m-blocks and route the W2 contraction
    #             through the MXU; at these shapes the VPU multiply + lane reduce is cheaper.
    pred = jnp.sum(h * w2_ref[...][None, :, :], axis=-1) + b2_ref[0]   # (N, M)
    # Lane-dense output: pad last dim to a multiple of 128 -> single unmasked store.
    if m_pad > n_trk:
        pred = jnp.concatenate(
            [pred, jnp.zeros((n_det, m_pad - n_trk), jnp.float32)], axis=-1)
    out_ref[...] = pred.astype(out_ref.dtype)


@functools.partial(jax.jit, static_argnames=("n_det", "n_trk"))
def edge_conv_forward(embeddings, adj, wt_t, wp_t, bsum, w1_t, b1, w2, b2,
                      *, n_det, n_trk):
    P, F = embeddings.shape
    L = wt_t.shape[0]
    H = w1_t.shape[1]
    m_pad = 128 * (-(-n_trk // 128))        # lane-padded output width (multiple of 128)
    tile_j = min(P, 512)                    # bounds the masked-max slab for large graphs

    kernel = functools.partial(_fused_edge_conv_kernel,
                               n_det=n_det, n_trk=n_trk, tile_j=tile_j)
    in_specs = _full_specs((P, F), (P, P), (L, F, F), (L, F, F), (L, 1, F),
                           (F, H), (1, H), (1, H))
    in_specs.append(pl.BlockSpec(memory_space=pltpu.MemorySpace.SMEM))  # scalar b2 via SMEM
    out_spec = pl.BlockSpec((n_det, m_pad), lambda i: (0, 0))

    pred_pad = pl.pallas_call(
        kernel,
        grid=(1,),
        in_specs=in_specs,
        out_specs=out_spec,
        out_shape=jax.ShapeDtypeStruct((n_det, m_pad), jnp.float32),
        compiler_params=pltpu.CompilerParams(dimension_semantics=("arbitrary",)),
    )(embeddings, adj, wt_t, wp_t, bsum, w1_t, b1, w2, b2)
    return pred_pad[:, :n_trk]              # slice the lane padding away in the wrapper


# --------------------------------------------------------------------------- #
# Module wrapper with deterministic parameter init (weights stored pre-transposed,
# stacked across layers, and pre-cast to bf16 for the MXU).
# --------------------------------------------------------------------------- #
class EdgeConvOpPallas:
    def __init__(self, feature_size=32, num_gnn_layers=4, regr_hidden=32,
                 mode='test', key=jax.random.PRNGKey(0)):
        self.mode = mode
        self.feature_size = feature_size
        self.num_gnn_layers = num_gnn_layers
        F, H, L = feature_size, regr_hidden, num_gnn_layers
        keys = jax.random.split(key, 4 * L + 4)
        s = 1.0 / jnp.sqrt(jnp.float32(F))

        wt_t, wp_t, bsum = [], [], []
        for l in range(L):
            k0, k1, k2, k3 = keys[4 * l: 4 * l + 4]
            w_theta = jax.random.normal(k0, (F, F), jnp.float32) * s
            b_theta = jax.random.normal(k1, (F,), jnp.float32) * s
            w_phi = jax.random.normal(k2, (F, F), jnp.float32) * s
            b_phi = jax.random.normal(k3, (F,), jnp.float32) * s
            wt_t.append(w_theta.T)                        # transpose hoisted to init
            wp_t.append(w_phi.T)
            bsum.append((b_theta + b_phi).reshape(1, F))  # bias sum hoisted to init
        self.wt_t = jnp.stack(wt_t).astype(jnp.bfloat16)  # (L, F, F) bf16 MXU operand
        self.wp_t = jnp.stack(wp_t).astype(jnp.bfloat16)  # (L, F, F)
        self.bsum = jnp.stack(bsum)                       # (L, 1, F) f32

        kr0, kr1, kr2, kr3 = keys[-4:]
        w1 = jax.random.normal(kr0, (H, F), jnp.float32) * s
        self.w1_t = w1.T.astype(jnp.bfloat16)             # (F, H) bf16
        self.b1 = (jax.random.normal(kr1, (H,), jnp.float32) * s).reshape(1, H)
        self.w2 = jax.random.normal(kr2, (1, H), jnp.float32) * (1.0 / jnp.sqrt(jnp.float32(H)))
        self.b2 = jax.random.normal(kr3, (1,), jnp.float32) * 0.0   # (1,) f32, via SMEM

    def __call__(self, adj, embeddings, gt_aff_mat, N, M):
        # With loss_every_layer=True the per-layer pred_aff_mat only feeds the train-mode
        # losses; in 'test' mode computing it once from the final embeddings is equivalent.
        del gt_aff_mat  # unused in 'test' mode
        return edge_conv_forward(embeddings, adj, self.wt_t, self.wp_t, self.bsum,
                                 self.w1_t, self.b1, self.w2, self.b2,
                                 n_det=N, n_trk=M)


if __name__ == "__main__":
    key = jax.random.PRNGKey(0)
    N, M, F = 8, 4, 32           # detected objects, tracked objects, feature size
    P = N + M                    # total graph nodes
    k_emb, k_gt, k_params = jax.random.split(key, 3)

    embeddings = jax.random.normal(k_emb, (P, F), jnp.float32)

    # synthetic graph: bipartite edges between detections and tracks + self loops
    adj = jnp.zeros((P, P), jnp.float32)
    adj = adj.at[:N, N:].set(1.0)
    adj = adj.at[N:, :N].set(1.0)
    adj = adj + jnp.eye(P, dtype=jnp.float32)

    gt_aff_mat = (jax.random.uniform(k_gt, (N, M)) > 0.5).astype(jnp.float32)  # unused ('test')

    model = EdgeConvOpPallas(feature_size=F, num_gnn_layers=4, regr_hidden=32,
                             mode='test', key=k_params)
    pred_aff_mat = model(adj, embeddings, gt_aff_mat, N, M)
    pred_aff_mat = jax.block_until_ready(pred_aff_mat)

    assert pred_aff_mat.shape == (N, M)
    assert bool(jnp.all(jnp.isfinite(pred_aff_mat)))
    print("KERNEL_OK")
</pallas_src>

<mosaic_0001>
module attributes {stable_mosaic.version = 11 : i64} {
  func.func @_fused_edge_conv_kernel(%arg0: i32, %arg1: memref<12x32xf32, #tpu.memory_space<vmem>>, %arg2: memref<12x12xf32, #tpu.memory_space<vmem>>, %arg3: memref<4x32x32xbf16, #tpu.memory_space<vmem>>, %arg4: memref<4x32x32xbf16, #tpu.memory_space<vmem>>, %arg5: memref<4x1x32xf32, #tpu.memory_space<vmem>>, %arg6: memref<32x32xbf16, #tpu.memory_space<vmem>>, %arg7: memref<1x32xf32, #tpu.memory_space<vmem>>, %arg8: memref<1x32xf32, #tpu.memory_space<vmem>>, %arg9: memref<1xf32, #tpu.memory_space<smem>>, %arg10: memref<8x128xf32, #tpu.memory_space<vmem>>) attributes {dimension_semantics = [#tpu.dimension_semantics<arbitrary>], iteration_bounds = array<i64: 1>, scalar_prefetch = 0 : i64, scratch_operands = 0 : i64, tpu.core_type = #tpu.core_type<tc>, window_params = [{pipeline_mode = #tpu.pipeline_mode<synchronous>, transform_indices = @transform_0, window_bounds = array<i64: 12, 32>}, {pipeline_mode = #tpu.pipeline_mode<synchronous>, transform_indices = @transform_1, window_bounds = array<i64: 12, 12>}, {pipeline_mode = #tpu.pipeline_mode<synchronous>, transform_indices = @transform_2, window_bounds = array<i64: 4, 32, 32>}, {pipeline_mode = #tpu.pipeline_mode<synchronous>, transform_indices = @transform_3, window_bounds = array<i64: 4, 32, 32>}, {pipeline_mode = #tpu.pipeline_mode<synchronous>, transform_indices = @transform_4, window_bounds = array<i64: 4, 1, 32>}, {pipeline_mode = #tpu.pipeline_mode<synchronous>, transform_indices = @transform_5, window_bounds = array<i64: 32, 32>}, {pipeline_mode = #tpu.pipeline_mode<synchronous>, transform_indices = @transform_6, window_bounds = array<i64: 1, 32>}, {pipeline_mode = #tpu.pipeline_mode<synchronous>, transform_indices = @transform_7, window_bounds = array<i64: 1, 32>}, {transform_indices = @transform_8, window_bounds = array<i64: 1>}, {pipeline_mode = #tpu.pipeline_mode<synchronous>, transform_indices = @transform_9, window_bounds = array<i64: 8, 128>}]} {
    %c0 = arith.constant 0 : index
    %c0_0 = arith.constant 0 : index
    %0 = vector.load %arg1[%c0, %c0_0] : memref<12x32xf32, #tpu.memory_space<vmem>>, vector<12x32xf32>
    %c0_1 = arith.constant 0 : index
    %c0_2 = arith.constant 0 : index
    %1 = vector.load %arg2[%c0_1, %c0_2] : memref<12x12xf32, #tpu.memory_space<vmem>>, vector<12x12xf32>
    %cst = arith.constant 0.000000e+00 : f32
    %2 = vector.broadcast %cst : f32 to vector<12x12xf32>
    %3 = arith.cmpf ogt, %1, %2 : vector<12x12xf32>
    %cst_3 = arith.constant 0.000000e+00 : f32
    %cst_4 = arith.constant -1.000000e+30 : f32
    %4 = vector.broadcast %cst_3 : f32 to vector<12x12xf32>
    %5 = vector.broadcast %cst_4 : f32 to vector<12x12xf32>
    %6 = arith.select %3, %4, %5 : vector<12x12xi1>, vector<12x12xf32>
    %7 = arith.truncf %0 : vector<12x32xf32> to vector<12x32xbf16>
    %c0_5 = arith.constant 0 : index
    %c0_6 = arith.constant 0 : index
    %c0_7 = arith.constant 0 : index
    %8 = vector.load %arg3[%c0_5, %c0_6, %c0_7] : memref<4x32x32xbf16, #tpu.memory_space<vmem>>, vector<1x32x32xbf16>
    %9 = vector.shape_cast %8 : vector<1x32x32xbf16> to vector<32x32xbf16>
    %cst_8 = arith.constant dense<0.000000e+00> : vector<12x32xf32>
    %10 = tpu.matmul %7, %9, %cst_8 {dimension_numbers = #tpu.dot_dimension_numbers<[1], [0], [0], [1], [0, 0, 1, 1], [], []>} : vector<12x32xbf16>, vector<32x32xbf16>, vector<12x32xf32> -> vector<12x32xf32>
    %c0_9 = arith.constant 0 : index
    %c0_10 = arith.constant 0 : index
    %c0_11 = arith.constant 0 : index
    %11 = vector.load %arg4[%c0_9, %c0_10, %c0_11] : memref<4x32x32xbf16, #tpu.memory_space<vmem>>, vector<1x32x32xbf16>
    %12 = vector.shape_cast %11 : vector<1x32x32xbf16> to vector<32x32xbf16>
    %cst_12 = arith.constant dense<0.000000e+00> : vector<12x32xf32>
    %13 = tpu.matmul %7, %12, %cst_12 {dimension_numbers = #tpu.dot_dimension_numbers<[1], [0], [0], [1], [0, 0, 1, 1], [], []>} : vector<12x32xbf16>, vector<32x32xbf16>, vector<12x32xf32> -> vector<12x32xf32>
    %cst_13 = arith.constant -1.000000e+30 : f32
    %14 = vector.broadcast %cst_13 : f32 to vector<12x32xf32>
    %15 = vector.shape_cast %10 : vector<12x32xf32> to vector<1x12x32xf32>
    %16 = vector.shape_cast %6 : vector<12x12xf32> to vector<12x12x1xf32>
    %17 = vector.broadcast %15 : vector<1x12x32xf32> to vector<12x12x32xf32>
    %18 = vector.broadcast %16 : vector<12x12x1xf32> to vector<12x12x32xf32>
    %19 = arith.addf %17, %18 : vector<12x12x32xf32>
    %cst_14 = arith.constant dense<0xFF800000> : vector<12x32xf32>
    %20 = vector.multi_reduction <maximumf>, %19, %cst_14 [1] : vector<12x12x32xf32> to vector<12x32xf32>
    %21 = arith.maximumf %14, %20 : vector<12x32xf32>
    %22 = arith.subf %21, %10 : vector<12x32xf32>
    %23 = arith.addf %22, %13 : vector<12x32xf32>
    %c0_15 = arith.constant 0 : index
    %c0_16 = arith.constant 0 : index
    %c0_17 = arith.constant 0 : index
    %24 = vector.load %arg5[%c0_15, %c0_16, %c0_17] : memref<4x1x32xf32, #tpu.memory_space<vmem>>, vector<1x1x32xf32>
    %25 = vector.shape_cast %24 : vector<1x1x32xf32> to vector<1x32xf32>
    %26 = vector.broadcast %25 : vector<1x32xf32> to vector<12x32xf32>
    %27 = arith.addf %23, %26 : vector<12x32xf32>
    %cst_18 = arith.constant 0.000000e+00 : f32
    %28 = vector.broadcast %cst_18 : f32 to vector<12x32xf32>
    %29 = arith.maximumf %27, %28 : vector<12x32xf32>
    %30 = arith.truncf %29 : vector<12x32xf32> to vector<12x32xbf16>
    %c1 = arith.constant 1 : index
    %c0_19 = arith.constant 0 : index
    %c0_20 = arith.constant 0 : index
    %31 = vector.load %arg3[%c1, %c0_19, %c0_20] : memref<4x32x32xbf16, #tpu.memory_space<vmem>>, vector<1x32x32xbf16>
    %32 = vector.shape_cast %31 : vector<1x32x32xbf16> to vector<32x32xbf16>
    %cst_21 = arith.constant dense<0.000000e+00> : vector<12x32xf32>
    %33 = tpu.matmul %30, %32, %cst_21 {dimension_numbers = #tpu.dot_dimension_numbers<[1], [0], [0], [1], [0, 0, 1, 1], [], []>} : vector<12x32xbf16>, vector<32x32xbf16>, vector<12x32xf32> -> vector<12x32xf32>
    %c1_22 = arith.constant 1 : index
    %c0_23 = arith.constant 0 : index
    %c0_24 = arith.constant 0 : index
    %34 = vector.load %arg4[%c1_22, %c0_23, %c0_24] : memref<4x32x32xbf16, #tpu.memory_space<vmem>>, vector<1x32x32xbf16>
    %35 = vector.shape_cast %34 : vector<1x32x32xbf16> to vector<32x32xbf16>
    %cst_25 = arith.constant dense<0.000000e+00> : vector<12x32xf32>
    %36 = tpu.matmul %30, %35, %cst_25 {dimension_numbers = #tpu.dot_dimension_numbers<[1], [0], [0], [1], [0, 0, 1, 1], [], []>} : vector<12x32xbf16>, vector<32x32xbf16>, vector<12x32xf32> -> vector<12x32xf32>
    %cst_26 = arith.constant -1.000000e+30 : f32
    %37 = vector.broadcast %cst_26 : f32 to vector<12x32xf32>
    %38 = vector.shape_cast %33 : vector<12x32xf32> to vector<1x12x32xf32>
    %39 = vector.shape_cast %6 : vector<12x12xf32> to vector<12x12x1xf32>
    %40 = vector.broadcast %38 : vector<1x12x32xf32> to vector<12x12x32xf32>
    %41 = vector.broadcast %39 : vector<12x12x1xf32> to vector<12x12x32xf32>
    %42 = arith.addf %40, %41 : vector<12x12x32xf32>
    %cst_27 = arith.constant dense<0xFF800000> : vector<12x32xf32>
    %43 = vector.multi_reduction <maximumf>, %42, %cst_27 [1] : vector<12x12x32xf32> to vector<12x32xf32>
    %44 = arith.maximumf %37, %43 : vector<12x32xf32>
    %45 = arith.subf %44, %33 : vector<12x32xf32>
    %46 = arith.addf %45, %36 : vector<12x32xf32>
    %c1_28 = arith.constant 1 : index
    %c0_29 = arith.constant 0 : index
    %c0_30 = arith.constant 0 : index
    %47 = vector.load %arg5[%c1_28, %c0_29, %c0_30] : memref<4x1x32xf32, #tpu.memory_space<vmem>>, vector<1x1x32xf32>
    %48 = vector.shape_cast %47 : vector<1x1x32xf32> to vector<1x32xf32>
    %49 = vector.broadcast %48 : vector<1x32xf32> to vector<12x32xf32>
    %50 = arith.addf %46, %49 : vector<12x32xf32>
    %cst_31 = arith.constant 0.000000e+00 : f32
    %51 = vector.broadcast %cst_31 : f32 to vector<12x32xf32>
    %52 = arith.maximumf %50, %51 : vector<12x32xf32>
    %53 = arith.truncf %52 : vector<12x32xf32> to vector<12x32xbf16>
    %c2 = arith.constant 2 : index
    %c0_32 = arith.constant 0 : index
    %c0_33 = arith.constant 0 : index
    %54 = vector.load %arg3[%c2, %c0_32, %c0_33] : memref<4x32x32xbf16, #tpu.memory_space<vmem>>, vector<1x32x32xbf16>
    %55 = vector.shape_cast %54 : vector<1x32x32xbf16> to vector<32x32xbf16>
    %cst_34 = arith.constant dense<0.000000e+00> : vector<12x32xf32>
    %56 = tpu.matmul %53, %55, %cst_34 {dimension_numbers = #tpu.dot_dimension_numbers<[1], [0], [0], [1], [0, 0, 1, 1], [], []>} : vector<12x32xbf16>, vector<32x32xbf16>, vector<12x32xf32> -> vector<12x32xf32>
    %c2_35 = arith.constant 2 : index
    %c0_36 = arith.constant 0 : index
    %c0_37 = arith.constant 0 : index
    %57 = vector.load %arg4[%c2_35, %c0_36, %c0_37] : memref<4x32x32xbf16, #tpu.memory_space<vmem>>, vector<1x32x32xbf16>
    %58 = vector.shape_cast %57 : vector<1x32x32xbf16> to vector<32x32xbf16>
    %cst_38 = arith.constant dense<0.000000e+00> : vector<12x32xf32>
    %59 = tpu.matmul %53, %58, %cst_38 {dimension_numbers = #tpu.dot_dimension_numbers<[1], [0], [0], [1], [0, 0, 1, 1], [], []>} : vector<12x32xbf16>, vector<32x32xbf16>, vector<12x32xf32> -> vector<12x32xf32>
    %cst_39 = arith.constant -1.000000e+30 : f32
    %60 = vector.broadcast %cst_39 : f32 to vector<12x32xf32>
    %61 = vector.shape_cast %56 : vector<12x32xf32> to vector<1x12x32xf32>
    %62 = vector.shape_cast %6 : vector<12x12xf32> to vector<12x12x1xf32>
    %63 = vector.broadcast %61 : vector<1x12x32xf32> to vector<12x12x32xf32>
    %64 = vector.broadcast %62 : vector<12x12x1xf32> to vector<12x12x32xf32>
    %65 = arith.addf %63, %64 : vector<12x12x32xf32>
    %cst_40 = arith.constant dense<0xFF800000> : vector<12x32xf32>
    %66 = vector.multi_reduction <maximumf>, %65, %cst_40 [1] : vector<12x12x32xf32> to vector<12x32xf32>
    %67 = arith.maximumf %60, %66 : vector<12x32xf32>
    %68 = arith.subf %67, %56 : vector<12x32xf32>
    %69 = arith.addf %68, %59 : vector<12x32xf32>
    %c2_41 = arith.constant 2 : index
    %c0_42 = arith.constant 0 : index
    %c0_43 = arith.constant 0 : index
    %70 = vector.load %arg5[%c2_41, %c0_42, %c0_43] : memref<4x1x32xf32, #tpu.memory_space<vmem>>, vector<1x1x32xf32>
    %71 = vector.shape_cast %70 : vector<1x1x32xf32> to vector<1x32xf32>
    %72 = vector.broadcast %71 : vector<1x32xf32> to vector<12x32xf32>
    %73 = arith.addf %69, %72 : vector<12x32xf32>
    %cst_44 = arith.constant 0.000000e+00 : f32
    %74 = vector.broadcast %cst_44 : f32 to vector<12x32xf32>
    %75 = arith.maximumf %73, %74 : vector<12x32xf32>
    %76 = arith.truncf %75 : vector<12x32xf32> to vector<12x32xbf16>
    %c3 = arith.constant 3 : index
    %c0_45 = arith.constant 0 : index
    %c0_46 = arith.constant 0 : index
    %77 = vector.load %arg3[%c3, %c0_45, %c0_46] : memref<4x32x32xbf16, #tpu.memory_space<vmem>>, vector<1x32x32xbf16>
    %78 = vector.shape_cast %77 : vector<1x32x32xbf16> to vector<32x32xbf16>
    %cst_47 = arith.constant dense<0.000000e+00> : vector<12x32xf32>
    %79 = tpu.matmul %76, %78, %cst_47 {dimension_numbers = #tpu.dot_dimension_numbers<[1], [0], [0], [1], [0, 0, 1, 1], [], []>} : vector<12x32xbf16>, vector<32x32xbf16>, vector<12x32xf32> -> vector<12x32xf32>
    %c3_48 = arith.constant 3 : index
    %c0_49 = arith.constant 0 : index
    %c0_50 = arith.constant 0 : index
    %80 = vector.load %arg4[%c3_48, %c0_49, %c0_50] : memref<4x32x32xbf16, #tpu.memory_space<vmem>>, vector<1x32x32xbf16>
    %81 = vector.shape_cast %80 : vector<1x32x32xbf16> to vector<32x32xbf16>
    %cst_51 = arith.constant dense<0.000000e+00> : vector<12x32xf32>
    %82 = tpu.matmul %76, %81, %cst_51 {dimension_numbers = #tpu.dot_dimension_numbers<[1], [0], [0], [1], [0, 0, 1, 1], [], []>} : vector<12x32xbf16>, vector<32x32xbf16>, vector<12x32xf32> -> vector<12x32xf32>
    %cst_52 = arith.constant -1.000000e+30 : f32
    %83 = vector.broadcast %cst_52 : f32 to vector<12x32xf32>
    %84 = vector.shape_cast %79 : vector<12x32xf32> to vector<1x12x32xf32>
    %85 = vector.shape_cast %6 : vector<12x12xf32> to vector<12x12x1xf32>
    %86 = vector.broadcast %84 : vector<1x12x32xf32> to vector<12x12x32xf32>
    %87 = vector.broadcast %85 : vector<12x12x1xf32> to vector<12x12x32xf32>
    %88 = arith.addf %86, %87 : vector<12x12x32xf32>
    %cst_53 = arith.constant dense<0xFF800000> : vector<12x32xf32>
    %89 = vector.multi_reduction <maximumf>, %88, %cst_53 [1] : vector<12x12x32xf32> to vector<12x32xf32>
    %90 = arith.maximumf %83, %89 : vector<12x32xf32>
    %91 = arith.subf %90, %79 : vector<12x32xf32>
    %92 = arith.addf %91, %82 : vector<12x32xf32>
    %c3_54 = arith.constant 3 : index
    %c0_55 = arith.constant 0 : index
    %c0_56 = arith.constant 0 : index
    %93 = vector.load %arg5[%c3_54, %c0_55, %c0_56] : memref<4x1x32xf32, #tpu.memory_space<vmem>>, vector<1x1x32xf32>
    %94 = vector.shape_cast %93 : vector<1x1x32xf32> to vector<1x32xf32>
    %95 = vector.broadcast %94 : vector<1x32xf32> to vector<12x32xf32>
    %96 = arith.addf %92, %95 : vector<12x32xf32>
    %cst_57 = arith.constant 0.000000e+00 : f32
    %97 = vector.broadcast %cst_57 : f32 to vector<12x32xf32>
    %98 = arith.maximumf %96, %97 : vector<12x32xf32>
    %99 = vector.extract_strided_slice %98 {offsets = [0, 0], sizes = [8, 32], strides = [1, 1]} : vector<12x32xf32> to vector<8x32xf32>
    %100 = vector.extract_strided_slice %98 {offsets = [8, 0], sizes = [4, 32], strides = [1, 1]} : vector<12x32xf32> to vector<4x32xf32>
    %101 = arith.truncf %100 : vector<4x32xf32> to vector<4x32xbf16>
    %c0_58 = arith.constant 0 : index
    %c0_59 = arith.constant 0 : index
    %102 = vector.load %arg6[%c0_58, %c0_59] : memref<32x32xbf16, #tpu.memory_space<vmem>>, vector<32x32xbf16>
    %cst_60 = arith.constant dense<0.000000e+00> : vector<4x32xf32>
    %103 = tpu.matmul %101, %102, %cst_60 {dimension_numbers = #tpu.dot_dimension_numbers<[1], [0], [0], [1], [0, 0, 1, 1], [], []>} : vector<4x32xbf16>, vector<32x32xbf16>, vector<4x32xf32> -> vector<4x32xf32>
    %104 = arith.truncf %99 : vector<8x32xf32> to vector<8x32xbf16>
    %c0_61 = arith.constant 0 : index
    %c0_62 = arith.constant 0 : index
    %105 = vector.load %arg6[%c0_61, %c0_62] : memref<32x32xbf16, #tpu.memory_space<vmem>>, vector<32x32xbf16>
    %cst_63 = arith.constant dense<0.000000e+00> : vector<8x32xf32>
    %106 = tpu.matmul %104, %105, %cst_63 {dimension_numbers = #tpu.dot_dimension_numbers<[1], [0], [0], [1], [0, 0, 1, 1], [], []>} : vector<8x32xbf16>, vector<32x32xbf16>, vector<8x32xf32> -> vector<8x32xf32>
    %107 = vector.shape_cast %103 : vector<4x32xf32> to vector<1x4x32xf32>
    %108 = vector.shape_cast %106 : vector<8x32xf32> to vector<8x1x32xf32>
    %109 = vector.broadcast %107 : vector<1x4x32xf32> to vector<8x4x32xf32>
    %110 = vector.broadcast %108 : vector<8x1x32xf32> to vector<8x4x32xf32>
    %111 = arith.subf %109, %110 : vector<8x4x32xf32>
    %c0_64 = arith.constant 0 : index
    %c0_65 = arith.constant 0 : index
    %112 = vector.load %arg7[%c0_64, %c0_65] : memref<1x32xf32, #tpu.memory_space<vmem>>, vector<1x32xf32>
    %113 = vector.shape_cast %112 : vector<1x32xf32> to vector<1x1x32xf32>
    %114 = vector.broadcast %113 : vector<1x1x32xf32> to vector<8x4x32xf32>
    %115 = arith.addf %111, %114 : vector<8x4x32xf32>
    %cst_66 = arith.constant 0.000000e+00 : f32
    %116 = vector.broadcast %cst_66 : f32 to vector<8x4x32xf32>
    %117 = arith.maximumf %115, %116 : vector<8x4x32xf32>
    %c0_67 = arith.constant 0 : index
    %c0_68 = arith.constant 0 : index
    %118 = vector.load %arg8[%c0_67, %c0_68] : memref<1x32xf32, #tpu.memory_space<vmem>>, vector<1x32xf32>
    %119 = vector.shape_cast %118 : vector<1x32xf32> to vector<1x1x32xf32>
    %120 = vector.broadcast %119 : vector<1x1x32xf32> to vector<8x4x32xf32>
    %121 = arith.mulf %117, %120 : vector<8x4x32xf32>
    %cst_69 = arith.constant dense<0.000000e+00> : vector<8x4xf32>
    %122 = vector.multi_reduction <add>, %121, %cst_69 [2] : vector<8x4x32xf32> to vector<8x4xf32>
    %c0_70 = arith.constant 0 : index
    %123 = memref.load %arg9[%c0_70] : memref<1xf32, #tpu.memory_space<smem>>
    %124 = vector.broadcast %123 : f32 to vector<8x4xf32>
    %125 = arith.addf %122, %124 : vector<8x4xf32>
    %cst_71 = arith.constant 0.000000e+00 : f32
    %126 = vector.broadcast %cst_71 : f32 to vector<8x124xf32>
    %127 = tpu.concatenate %125, %126 in 1 : vector<8x4xf32>, vector<8x124xf32> -> vector<8x128xf32>
    %c0_72 = arith.constant 0 : index
    %c0_73 = arith.constant 0 : index
    %128 = vector.load %arg10[%c0_72, %c0_73] : memref<8x128xf32, #tpu.memory_space<vmem>>, vector<8x128xf32>
    tpu.vector_store %arg10[%c0_72, %c0_73], %127 {strides = array<i32>} : memref<8x128xf32, #tpu.memory_space<vmem>>, vector<8x128xf32>,
    return
  }
  func.func @transform_0(%arg0: i32) -> (i32, i32) {
    %c0_i32 = arith.constant 0 : i32
    %c0_i32_0 = arith.constant 0 : i32
    %c0_i32_1 = arith.constant 0 : i32
    return %c0_i32, %c0_i32_0 : i32, i32
  }
  func.func @transform_1(%arg0: i32) -> (i32, i32) {
    %c0_i32 = arith.constant 0 : i32
    %c0_i32_0 = arith.constant 0 : i32
    %c0_i32_1 = arith.constant 0 : i32
    return %c0_i32, %c0_i32_0 : i32, i32
  }
  func.func @transform_2(%arg0: i32) -> (i32, i32, i32) {
    %c0_i32 = arith.constant 0 : i32
    %c0_i32_0 = arith.constant 0 : i32
    %c0_i32_1 = arith.constant 0 : i32
    %c0_i32_2 = arith.constant 0 : i32
    return %c0_i32, %c0_i32_0, %c0_i32_1 : i32, i32, i32
  }
  func.func @transform_3(%arg0: i32) -> (i32, i32, i32) {
    %c0_i32 = arith.constant 0 : i32
    %c0_i32_0 = arith.constant 0 : i32
    %c0_i32_1 = arith.constant 0 : i32
    %c0_i32_2 = arith.constant 0 : i32
    return %c0_i32, %c0_i32_0, %c0_i32_1 : i32, i32, i32
  }
  func.func @transform_4(%arg0: i32) -> (i32, i32, i32) {
    %c0_i32 = arith.constant 0 : i32
    %c0_i32_0 = arith.constant 0 : i32
    %c0_i32_1 = arith.constant 0 : i32
    %c0_i32_2 = arith.constant 0 : i32
    return %c0_i32, %c0_i32_0, %c0_i32_1 : i32, i32, i32
  }
  func.func @transform_5(%arg0: i32) -> (i32, i32) {
    %c0_i32 = arith.constant 0 : i32
    %c0_i32_0 = arith.constant 0 : i32
    %c0_i32_1 = arith.constant 0 : i32
    return %c0_i32, %c0_i32_0 : i32, i32
  }
  func.func @transform_6(%arg0: i32) -> (i32, i32) {
    %c0_i32 = arith.constant 0 : i32
    %c0_i32_0 = arith.constant 0 : i32
    %c0_i32_1 = arith.constant 0 : i32
    return %c0_i32, %c0_i32_0 : i32, i32
  }
  func.func @transform_7(%arg0: i32) -> (i32, i32) {
    %c0_i32 = arith.constant 0 : i32
    %c0_i32_0 = arith.constant 0 : i32
    %c0_i32_1 = arith.constant 0 : i32
    return %c0_i32, %c0_i32_0 : i32, i32
  }
  func.func @transform_8(%arg0: i32) -> i32 {
    %c0_i32 = arith.constant 0 : i32
    %c0_i32_0 = arith.constant 0 : i32
    return %c0_i32 : i32
  }
  func.func @transform_9(%arg0: i32) -> (i32, i32) {
    %c0_i32 = arith.constant 0 : i32
    %c0_i32_0 = arith.constant 0 : i32
    %c0_i32_1 = arith.constant 0 : i32
    return %c0_i32, %c0_i32_0 : i32, i32
  }
}

</mosaic_0001>

<llo_original>
// kernel: edge_conv_forward.1
$region0: #{edge_conv_forward.1}
  #allocation0 [shape = 'u32[]', space=smem, size = 0x4, offset = 0x4, fixed_abs, tag = 'smem constant byte address 0x4 - core index']
  #allocation1 [shape = 'u32[144,128]{1,0:T(1,128)}', space=vmem, size = 0x12000, scoped, tag = 'internal scratch']
  #allocation2 [shape = 'f32[1]{0:T(128)S(6)}', space=smem, size = 0x200, scoped, tag = 'scoped memory for edge_conv_forward.1']
  %s0 = inlined_call_operand.hbm [shape: f32[12,32], index: 0, kind: input, shape index: {}]
  %s1 = inlined_call_operand.hbm [shape: f32[12,12], index: 1, kind: input, shape index: {}]
  %s2 = inlined_call_operand.hbm [shape: bf16[4,32,32], index: 2, kind: input, shape index: {}]
  %s3 = inlined_call_operand.hbm [shape: bf16[4,32,32], index: 3, kind: input, shape index: {}]
  %s4 = inlined_call_operand.vmem [shape: f32[4,1,32], index: 4, kind: input, shape index: {}]
  %s5 = inlined_call_operand.vmem [shape: bf16[32,32], index: 5, kind: input, shape index: {}]
  %s6 = inlined_call_operand.vmem [shape: f32[1,32], index: 6, kind: input, shape index: {}]
  %s7 = inlined_call_operand.vmem [shape: f32[1,32], index: 7, kind: input, shape index: {}]
  %s8 = inlined_call_operand.<no memory space> [shape: f32[1], index: 8, kind: input, shape index: {}]
  %s9 = inlined_call_operand.vmem [shape: f32[8,128], index: 9, kind: output, shape index: {}]
  %s10 = sld [smem:[#allocation0]]
  $region62: #{edge_conv_forward.1} parent=0
    _
  %s12 = ssub.s32 1, %s10
  %s13 = scalar_select 0, %s12, %s10
  %14 = sst [smem:[#allocation2]] %s8
  $region1: #{edge_conv_forward.1} parent=0
    #allocation3 [shape = 'u8[8192]{0}', space=vmem, size = 0x2000, scoped, tag = 'input window, operand 0, single buffered']
    #allocation4 [shape = 's32[1]{0}', space=sflag, size = 0x4, scoped, tag = 'scoped memory for edge_conv_forward.1']
    #allocation5 [shape = 'u8[8192]{0}', space=vmem, size = 0x2000, scoped, tag = 'input window, operand 1, single buffered']
    #allocation6 [shape = 's32[1]{0}', space=sflag, size = 0x4, scoped, tag = 'scoped memory for edge_conv_forward.1']
    #allocation7 [shape = 'u8[32768]{0}', space=vmem, size = 0x8000, scoped, tag = 'input window, operand 2, single buffered']
    #allocation8 [shape = 'u8[32768]{0}', space=vmem, size = 0x8000, scoped, tag = 'input window, operand 3, single buffered']
    #allocation9 [shape = 's32[1]{0}', space=sflag, size = 0x4, scoped, tag = 'scoped memory for edge_conv_forward.1']
    %15 = vsyncpa [#allocation4], 0
    %16 = vsyncpa [#allocation6], 0
    %17 = vsyncpa [#allocation9], 0
    // Predicated region
    $region2: #{edge_conv_forward.1} parent=1 // pred_check
      _
    $region3: #{edge_conv_forward.1} parent=1 // pred_check_branch
      %19 = sbr.rel (0) target = $region5
    $region4: #{edge_conv_forward.1} parent=1 // pred_region
      %s21 = ssub.s32 256, 256
      %22 = vsyncadd [#allocation4], %s21
      %s23 = sshll.u32 [#allocation3], 4
      %s24 = int_to_ptr.vmem [resolvable:$true] %s23
      %29 = dma.hbm_to_vmem [thread:$0]  %s0, 256, %s24, [#allocation4], 128, 128, 8
    $region5: #{edge_conv_forward.1} parent=1 // pred_fallthru
      _
    // Predicated region
    $region6: #{edge_conv_forward.1} parent=1 // pred_check
      _
    $region7: #{edge_conv_forward.1} parent=1 // pred_check_branch
      %31 = sbr.rel (0) target = $region9
    $region8: #{edge_conv_forward.1} parent=1 // pred_region
      %s33 = ssub.s32 256, 256
      %34 = vsyncadd [#allocation6], %s33
      %s35 = sshll.u32 [#allocation5], 4
      %s36 = int_to_ptr.vmem [resolvable:$true] %s35
      %41 = dma.hbm_to_vmem [thread:$0]  %s1, 256, %s36, [#allocation6], 128, 128, 8
    $region9: #{edge_conv_forward.1} parent=1 // pred_fallthru
      _
    // Predicated region
    $region10: #{edge_conv_forward.1} parent=1 // pred_check
      _
    $region11: #{edge_conv_forward.1} parent=1 // pred_check_branch
      %43 = sbr.rel (0) target = $region13
    $region12: #{edge_conv_forward.1} parent=1 // pred_region
      %s45 = ssub.s32 1024, 1024
      %46 = vsyncadd [#allocation6], %s45
      %s47 = sshll.u32 [#allocation7], 4
      %s48 = int_to_ptr.vmem [resolvable:$true] %s47
      %53 = dma.hbm_to_vmem [thread:$0]  %s2, 1024, %s48, [#allocation6], 64, 64, 4
    $region13: #{edge_conv_forward.1} parent=1 // pred_fallthru
      _
    // Predicated region
    $region14: #{edge_conv_forward.1} parent=1 // pred_check
      _
    $region15: #{edge_conv_forward.1} parent=1 // pred_check_branch
      %55 = sbr.rel (0) target = $region17
    $region16: #{edge_conv_forward.1} parent=1 // pred_region
      %s57 = ssub.s32 1024, 1024
      %58 = vsyncadd [#allocation9], %s57
      %s59 = sshll.u32 [#allocation8], 4
      %s60 = int_to_ptr.vmem [resolvable:$true] %s59
      %65 = dma.hbm_to_vmem [thread:$0]  %s3, 1024, %s60, [#allocation9], 64, 64, 4
    $region17: #{edge_conv_forward.1} parent=1 // pred_fallthru
      _
    // Predicated region
    $region18: #{edge_conv_forward.1} parent=1 // pred_check
      _
    $region19: #{edge_conv_forward.1} parent=1 // pred_check_branch
      %67 = sbr.rel (0) target = $region21
    $region20: #{edge_conv_forward.1} parent=1 // pred_region
      _
    $region21: #{edge_conv_forward.1} parent=1 // pred_fallthru
      _
    // Predicated region
    $region22: #{edge_conv_forward.1} parent=1 // pred_check
      _
    $region23: #{edge_conv_forward.1} parent=1 // pred_check_branch
      %69 = sbr.rel (0) target = $region25
    $region24: #{edge_conv_forward.1} parent=1 // pred_region
      _
    $region25: #{edge_conv_forward.1} parent=1 // pred_fallthru
      _
    // Predicated region
    $region26: #{edge_conv_forward.1} parent=1 // pred_check
      _
    $region27: #{edge_conv_forward.1} parent=1 // pred_check_branch
      %71 = sbr.rel (0) target = $region29
    $region28: #{edge_conv_forward.1} parent=1 // pred_region
      _
    $region29: #{edge_conv_forward.1} parent=1 // pred_fallthru
      _
    // Predicated region
    $region30: #{edge_conv_forward.1} parent=1 // pred_check
      _
    $region31: #{edge_conv_forward.1} parent=1 // pred_check_branch
      %73 = sbr.rel (0) target = $region33
    $region32: #{edge_conv_forward.1} parent=1 // pred_region
      _
    $region33: #{edge_conv_forward.1} parent=1 // pred_fallthru
      _
    // Predicated region
    $region34: #{edge_conv_forward.1} parent=1 // pred_check
      _
    $region35: #{edge_conv_forward.1} parent=1 // pred_check_branch
      %75 = sbr.rel (0) target = $region37
    $region36: #{edge_conv_forward.1} parent=1 // pred_region
      _
    $region37: #{edge_conv_forward.1} parent=1 // pred_fallthru
      _
    // Predicated region
    $region38: #{edge_conv_forward.1} parent=1 // pred_check
      _
    $region39: #{edge_conv_forward.1} parent=1 // pred_check_branch
      %77 = sbr.rel (0) target = $region41
    $region40: #{edge_conv_forward.1} parent=1 // pred_region
      %78 = dma.done [#allocation4], 256
    $region41: #{edge_conv_forward.1} parent=1 // pred_fallthru
      _
    // Predicated region
    $region42: #{edge_conv_forward.1} parent=1 // pred_check
      _
    $region43: #{edge_conv_forward.1} parent=1 // pred_check_branch
      %80 = sbr.rel (0) target = $region45
    $region44: #{edge_conv_forward.1} parent=1 // pred_region
      %81 = dma.done [#allocation6], 256
    $region45: #{edge_conv_forward.1} parent=1 // pred_fallthru
      _
    // Predicated region
    $region46: #{edge_conv_forward.1} parent=1 // pred_check
      _
    $region47: #{edge_conv_forward.1} parent=1 // pred_check_branch
      %83 = sbr.rel (0) target = $region49
    $region48: #{edge_conv_forward.1} parent=1 // pred_region
      %84 = dma.done [#allocation6], 1024
    $region49: #{edge_conv_forward.1} parent=1 // pred_fallthru
      _
    // Predicated region
    $region50: #{edge_conv_forward.1} parent=1 // pred_check
      _
    $region51: #{edge_conv_forward.1} parent=1 // pred_check_branch
      %86 = sbr.rel (0) target = $region53
    $region52: #{edge_conv_forward.1} parent=1 // pred_region
      %87 = dma.done [#allocation9], 1024
    $region53: #{edge_conv_forward.1} parent=1 // pred_fallthru
      _
    %v89 = vld [vmem:[#allocation3] sm:$0xff]
    %v90 = vld [vmem:[#allocation3 + $0x8] sm:$0xf]
    %v91 = vld [vmem:[#allocation5] sm:$0xff]
    %v92 = vld [vmem:[#allocation5 + $0x8] sm:$0xf]
    %vm93 = vcmp.gt.f32.partialorder %v91, 0.0
    %vm94 = vcmp.gt.f32.partialorder %v92, 0.0
    %v95 = vsel %vm93, 0.0, -1e+30
    %v96 = vsel %vm94, 0.0, -1e+30
    %v97 = vpack.c.bf16 %v90, %v89
    %v98 = vld [vmem:[#allocation7] sm:$0xf]
    %v99 = vld [vmem:[#allocation7 + $0x4] sm:$0xf]
    %v100 = vld [vmem:[#allocation7 + $0x8] sm:$0xf]
    %v101 = vld [vmem:[#allocation7 + $0xc] sm:$0xf]
    %v106 = vunpack.c.l.b16 %v98
    %v107 = vunpack.c.l.b16 %v99
    %v108 = vunpack.c.l.b16 %v100
    %v109 = vunpack.c.l.b16 %v101
    %v110 = vpack.c.b16 %v107, %v106
    %v111 = vpack.c.b16 %v109, %v108
    %vm114 = vcmask 261120
    %v116 = vsel %vm114, %v97, 0
    %118 = vmatprep.subr.bf16.mxu0 0
    %119 = vmatpush1.bf16.msra.mxu0 %v110
    %120 = vmatprep.subr.bf16.mxu0 0
    %121 = vmatpush1.bf16.msra.mxu0 %v111
    %122 = vmatprep.subr.bf16.mxu0 0
    %123 = vmatpush1.bf16.msra.mxu0 0
    %124 = vmatprep.subr.bf16.mxu0 0
    %125 = vmatpush1.bf16.msra.mxu0 0
    %126 = vmatprep.subr.bf16.mxu0 0
    %127 = vmatpush1.bf16.msra.mxu0 0
    %128 = vmatprep.subr.bf16.mxu0 0
    %129 = vmatpush1.bf16.msra.mxu0 0
    %130 = vmatprep.subr.bf16.mxu0 0
    %131 = vmatpush1.bf16.msra.mxu0 0
    %132 = vmatprep.subr.bf16.mxu0 0
    %133 = vmatpush1.bf16.msra.mxu0 0
    %134 = vmatprep.subr.bf16.mxu0 0
    %135 = vmatpush1.bf16.msra.mxu0 0
    %136 = vmatprep.subr.bf16.mxu0 0
    %137 = vmatpush1.bf16.msra.mxu0 0
    %138 = vmatprep.subr.bf16.mxu0 0
    %139 = vmatpush1.bf16.msra.mxu0 0
    %140 = vmatprep.subr.bf16.mxu0 0
    %141 = vmatpush1.bf16.msra.mxu0 0
    %142 = vmatprep.subr.bf16.mxu0 0
    %143 = vmatpush1.bf16.msra.mxu0 0
    %144 = vmatprep.subr.bf16.mxu0 0
    %145 = vmatpush1.bf16.msra.mxu0 0
    %146 = vmatprep.subr.bf16.mxu0 0
    %147 = vmatpush1.bf16.msra.mxu0 0
    %148 = vmatprep.subr.bf16.mxu0 0
    %149 = vmatpush1.bf16.msra.mxu0 0
    %150 = vmatprep.mubr.bf16.mxu0 0
    %151 = vmatmul.mubr.bf16.gmra.mrb[0].mxu0 %v116
    %v152 = vpop.f32.mrb[0].mxu0
    %v153 = vadd.f32 0.0, %v152
    %v154 = vpop.f32.mrb[0].mxu0
    %v155 = vpop.f32.mrb[0].mxu0
    %v156 = vadd.f32 0.0, %v155
    %v157 = vpop.f32.mrb[0].mxu0
    %158 = vdwg.mxu0
    %v159 = vld [vmem:[#allocation8] sm:$0xf]
    %v160 = vld [vmem:[#allocation8 + $0x4] sm:$0xf]
    %v161 = vld [vmem:[#allocation8 + $0x8] sm:$0xf]
    %v162 = vld [vmem:[#allocation8 + $0xc] sm:$0xf]
    %v167 = vunpack.c.l.b16 %v159
    %v168 = vunpack.c.l.b16 %v160
    %v169 = vunpack.c.l.b16 %v161
    %v170 = vunpack.c.l.b16 %v162
    %v171 = vpack.c.b16 %v168, %v167
    %v172 = vpack.c.b16 %v170, %v169
    %175 = vmatprep.subr.bf16.mxu0 0
    %176 = vmatpush1.bf16.msra.mxu0 %v171
    %177 = vmatprep.subr.bf16.mxu0 0
    %178 = vmatpush1.bf16.msra.mxu0 %v172
    %179 = vmatprep.subr.bf16.mxu0 0
    %180 = vmatpush1.bf16.msra.mxu0 0
    %181 = vmatprep.subr.bf16.mxu0 0
    %182 = vmatpush1.bf16.msra.mxu0 0
    %183 = vmatprep.subr.bf16.mxu0 0
    %184 = vmatpush1.bf16.msra.mxu0 0
    %185 = vmatprep.subr.bf16.mxu0 0
    %186 = vmatpush1.bf16.msra.mxu0 0
    %187 = vmatprep.subr.bf16.mxu0 0
    %188 = vmatpush1.bf16.msra.mxu0 0
    %189 = vmatprep.subr.bf16.mxu0 0
    %190 = vmatpush1.bf16.msra.mxu0 0
    %191 = vmatprep.subr.bf16.mxu0 0
    %192 = vmatpush1.bf16.msra.mxu0 0
    %193 = vmatprep.subr.bf16.mxu0 0
    %194 = vmatpush1.bf16.msra.mxu0 0
    %195 = vmatprep.subr.bf16.mxu0 0
    %196 = vmatpush1.bf16.msra.mxu0 0
    %197 = vmatprep.subr.bf16.mxu0 0
    %198 = vmatpush1.bf16.msra.mxu0 0
    %199 = vmatprep.subr.bf16.mxu0 0
    %200 = vmatpush1.bf16.msra.mxu0 0
    %201 = vmatprep.subr.bf16.mxu0 0
    %202 = vmatpush1.bf16.msra.mxu0 0
    %203 = vmatprep.subr.bf16.mxu0 0
    %204 = vmatpush1.bf16.msra.mxu0 0
    %205 = vmatprep.subr.bf16.mxu0 0
    %206 = vmatpush1.bf16.msra.mxu0 0
    %207 = vmatprep.mubr.bf16.mxu0 0
    %208 = vmatmul.mubr.bf16.gmra.mrb[0].mxu0 %v116
    %v209 = vpop.f32.mrb[0].mxu0
    %v210 = vadd.f32 0.0, %v209
    %v211 = vpop.f32.mrb[0].mxu0
    %v212 = vpop.f32.mrb[0].mxu0
    %v213 = vadd.f32 0.0, %v212
    %v214 = vpop.f32.mrb[0].mxu0
    %215 = vdwg.mxu0
    %v216 = vlaneseq
    %v217 = vshrl.u32 %v216, 7
    %v218 = vsub.s32 0, %v217
    %v219 = vrot.slane %v95, %v218
    %221 = vbcast.lane.b32.xlu0 %v219, 256
    %v222 = vpop.permute.xlu0 %221
    %s224 = sor.u32 256, 8
    %225 = vbcast.lane.b32.xlu0 %v219, %s224
    %v226 = vpop.permute.xlu0 %225
    %v227 = vlaneseq
    %v228 = vshrl.u32 %v227, 7
    %v229 = vsub.s32 1, %v228
    %v230 = vrot.slane %v95, %v229
    %232 = vbcast.lane.b32.xlu0 %v230, 256
    %v233 = vpop.permute.xlu0 %232
    %s235 = sor.u32 256, 8
    %236 = vbcast.lane.b32.xlu0 %v230, %s235
    %v237 = vpop.permute.xlu0 %236
    %v238 = vlaneseq
    %v239 = vshrl.u32 %v238, 7
    %v240 = vsub.s32 2, %v239
    %v241 = vrot.slane %v95, %v240
    %243 = vbcast.lane.b32.xlu0 %v241, 256
    %v244 = vpop.permute.xlu0 %243
    %s246 = sor.u32 256, 8
    %247 = vbcast.lane.b32.xlu0 %v241, %s246
    %v248 = vpop.permute.xlu0 %247
    %v249 = vlaneseq
    %v250 = vshrl.u32 %v249, 7
    %v251 = vsub.s32 3, %v250
    %v252 = vrot.slane %v95, %v251
    %254 = vbcast.lane.b32.xlu0 %v252, 256
    %v255 = vpop.permute.xlu0 %254
    %s257 = sor.u32 256, 8
    %258 = vbcast.lane.b32.xlu0 %v252, %s257
    %v259 = vpop.permute.xlu0 %258
    %v260 = vlaneseq
    %v261 = vshrl.u32 %v260, 7
    %v262 = vsub.s32 4, %v261
    %v263 = vrot.slane %v95, %v262
    %265 = vbcast.lane.b32.xlu0 %v263, 256
    %v266 = vpop.permute.xlu0 %265
    %s268 = sor.u32 256, 8
    %269 = vbcast.lane.b32.xlu0 %v263, %s268
    %v270 = vpop.permute.xlu0 %269
    %v271 = vlaneseq
    %v272 = vshrl.u32 %v271, 7
    %v273 = vsub.s32 5, %v272
    %v274 = vrot.slane %v95, %v273
    %276 = vbcast.lane.b32.xlu0 %v274, 256
    %v277 = vpop.permute.xlu0 %276
    %s279 = sor.u32 256, 8
    %280 = vbcast.lane.b32.xlu0 %v274, %s279
    %v281 = vpop.permute.xlu0 %280
    %v282 = vlaneseq
    %v283 = vshrl.u32 %v282, 7
    %v284 = vsub.s32 6, %v283
    %v285 = vrot.slane %v95, %v284
    %287 = vbcast.lane.b32.xlu0 %v285, 256
    %v288 = vpop.permute.xlu0 %287
    %s290 = sor.u32 256, 8
    %291 = vbcast.lane.b32.xlu0 %v285, %s290
    %v292 = vpop.permute.xlu0 %291
    %v293 = vlaneseq
    %v294 = vshrl.u32 %v293, 7
    %v295 = vsub.s32 7, %v294
    %v296 = vrot.slane %v95, %v295
    %298 = vbcast.lane.b32.xlu0 %v296, 256
    %v299 = vpop.permute.xlu0 %298
    %s301 = sor.u32 256, 8
    %302 = vbcast.lane.b32.xlu0 %v296, %s301
    %v303 = vpop.permute.xlu0 %302
    %v304 = vlaneseq
    %v305 = vshrl.u32 %v304, 7
    %v306 = vsub.s32 0, %v305
    %v307 = vrot.slane %v96, %v306
    %309 = vbcast.lane.b32.xlu0 %v307, 256
    %v310 = vpop.permute.xlu0 %309
    %s312 = sor.u32 256, 8
    %313 = vbcast.lane.b32.xlu0 %v307, %s312
    %v314 = vpop.permute.xlu0 %313
    %v315 = vlaneseq
    %v316 = vshrl.u32 %v315, 7
    %v317 = vsub.s32 1, %v316
    %v318 = vrot.slane %v96, %v317
    %320 = vbcast.lane.b32.xlu0 %v318, 256
    %v321 = vpop.permute.xlu0 %320
    %s323 = sor.u32 256, 8
    %324 = vbcast.lane.b32.xlu0 %v318, %s323
    %v325 = vpop.permute.xlu0 %324
    %v326 = vlaneseq
    %v327 = vshrl.u32 %v326, 7
    %v328 = vsub.s32 2, %v327
    %v329 = vrot.slane %v96, %v328
    %331 = vbcast.lane.b32.xlu0 %v329, 256
    %v332 = vpop.permute.xlu0 %331
    %s334 = sor.u32 256, 8
    %335 = vbcast.lane.b32.xlu0 %v329, %s334
    %v336 = vpop.permute.xlu0 %335
    %v337 = vlaneseq
    %v338 = vshrl.u32 %v337, 7
    %v339 = vsub.s32 3, %v338
    %v340 = vrot.slane %v96, %v339
    %342 = vbcast.lane.b32.xlu0 %v340, 256
    %v343 = vpop.permute.xlu0 %342
    %s345 = sor.u32 256, 8
    %346 = vbcast.lane.b32.xlu0 %v340, %s345
    %v347 = vpop.permute.xlu0 %346
    %v348 = vadd.f32 %v153, %v222
    %v349 = vadd.f32 %v156, %v226
    %v350 = vadd.f32 %v153, %v233
    %v351 = vadd.f32 %v156, %v237
    %v352 = vadd.f32 %v153, %v244
    %v353 = vadd.f32 %v156, %v248
    %v354 = vadd.f32 %v153, %v255
    %v355 = vadd.f32 %v156, %v259
    %v356 = vadd.f32 %v153, %v266
    %v357 = vadd.f32 %v156, %v270
    %v358 = vadd.f32 %v153, %v277
    %v359 = vadd.f32 %v156, %v281
    %v360 = vadd.f32 %v153, %v288
    %v361 = vadd.f32 %v156, %v292
    %v362 = vadd.f32 %v153, %v299
    %v363 = vadd.f32 %v156, %v303
    %v364 = vadd.f32 %v153, %v310
    %v365 = vadd.f32 %v156, %v314
    %v366 = vadd.f32 %v153, %v321
    %v367 = vadd.f32 %v156, %v325
    %v368 = vadd.f32 %v153, %v332
    %v369 = vadd.f32 %v156, %v336
    %v370 = vadd.f32 %v153, %v343
    %v371 = vadd.f32 %v156, %v347
    %v372 = vsel %vm114, %v348, -inf
    %vm373 = vcmask 257024
    %v374 = vsel %vm373, %v349, -inf
    %v375 = vmax.f32 %v372, %v374
    %v376 = vrot.slane %v375, 4
    %v377 = vmax.f32 %v375, %v376
    %v378 = vrot.slane %v377, 2
    %v379 = vmax.f32 %v377, %v378
    %v380 = vrot.slane %v379, 1
    %v381 = vmax.f32 %v379, %v380
    %v382 = vsel %vm114, %v350, -inf
    %v383 = vsel %vm373, %v351, -inf
    %v384 = vmax.f32 %v382, %v383
    %v385 = vrot.slane %v384, 4
    %v386 = vmax.f32 %v384, %v385
    %v387 = vrot.slane %v386, 2
    %v388 = vmax.f32 %v386, %v387
    %v389 = vrot.slane %v388, 1
    %v390 = vmax.f32 %v388, %v389
    %v391 = vsel %vm114, %v352, -inf
    %v392 = vsel %vm373, %v353, -inf
    %v393 = vmax.f32 %v391, %v392
    %v394 = vrot.slane %v393, 4
    %v395 = vmax.f32 %v393, %v394
    %v396 = vrot.slane %v395, 2
    %v397 = vmax.f32 %v395, %v396
    %v398 = vrot.slane %v397, 1
    %v399 = vmax.f32 %v397, %v398
    %v400 = vsel %vm114, %v354, -inf
    %v401 = vsel %vm373, %v355, -inf
    %v402 = vmax.f32 %v400, %v401
    %v403 = vrot.slane %v402, 4
    %v404 = vmax.f32 %v402, %v403
    %v405 = vrot.slane %v404, 2
    %v406 = vmax.f32 %v404, %v405
    %v407 = vrot.slane %v406, 1
    %v408 = vmax.f32 %v406, %v407
    %v409 = vsel %vm114, %v356, -inf
    %v410 = vsel %vm373, %v357, -inf
    %v411 = vmax.f32 %v409, %v410
    %v412 = vrot.slane %v411, 4
    %v413 = vmax.f32 %v411, %v412
    %v414 = vrot.slane %v413, 2
    %v415 = vmax.f32 %v413, %v414
    %v416 = vrot.slane %v415, 1
    %v417 = vmax.f32 %v415, %v416
    %v418 = vsel %vm114, %v358, -inf
    %v419 = vsel %vm373, %v359, -inf
    %v420 = vmax.f32 %v418, %v419
    %v421 = vrot.slane %v420, 4
    %v422 = vmax.f32 %v420, %v421
    %v423 = vrot.slane %v422, 2
    %v424 = vmax.f32 %v422, %v423
    %v425 = vrot.slane %v424, 1
    %v426 = vmax.f32 %v424, %v425
    %v427 = vsel %vm114, %v360, -inf
    %v428 = vsel %vm373, %v361, -inf
    %v429 = vmax.f32 %v427, %v428
    %v430 = vrot.slane %v429, 4
    %v431 = vmax.f32 %v429, %v430
    %v432 = vrot.slane %v431, 2
    %v433 = vmax.f32 %v431, %v432
    %v434 = vrot.slane %v433, 1
    %v435 = vmax.f32 %v433, %v434
    %v436 = vsel %vm114, %v362, -inf
    %v437 = vsel %vm373, %v363, -inf
    %v438 = vmax.f32 %v436, %v437
    %v439 = vrot.slane %v438, 4
    %v440 = vmax.f32 %v438, %v439
    %v441 = vrot.slane %v440, 2
    %v442 = vmax.f32 %v440, %v441
    %v443 = vrot.slane %v442, 1
    %v444 = vmax.f32 %v442, %v443
    %v445 = vsel %vm114, %v364, -inf
    %v446 = vsel %vm373, %v365, -inf
    %v447 = vmax.f32 %v445, %v446
    %v448 = vrot.slane %v447, 4
    %v449 = vmax.f32 %v447, %v448
    %v450 = vrot.slane %v449, 2
    %v451 = vmax.f32 %v449, %v450
    %v452 = vrot.slane %v451, 1
    %v453 = vmax.f32 %v451, %v452
    %v454 = vsel %vm114, %v366, -inf
    %v455 = vsel %vm373, %v367, -inf
    %v456 = vmax.f32 %v454, %v455
    %v457 = vrot.slane %v456, 4
    %v458 = vmax.f32 %v456, %v457
    %v459 = vrot.slane %v458, 2
    %v460 = vmax.f32 %v458, %v459
    %v461 = vrot.slane %v460, 1
    %v462 = vmax.f32 %v460, %v461
    %v463 = vsel %vm114, %v368, -inf
    %v464 = vsel %vm373, %v369, -inf
    %v465 = vmax.f32 %v463, %v464
    %v466 = vrot.slane %v465, 4
    %v467 = vmax.f32 %v465, %v466
    %v468 = vrot.slane %v467, 2
    %v469 = vmax.f32 %v467, %v468
    %v470 = vrot.slane %v469, 1
    %v471 = vmax.f32 %v469, %v470
    %v472 = vsel %vm114, %v370, -inf
    %v473 = vsel %vm373, %v371, -inf
    %v474 = vmax.f32 %v472, %v473
    %v475 = vrot.slane %v474, 4
    %v476 = vmax.f32 %v474, %v475
    %v477 = vrot.slane %v476, 2
    %v478 = vmax.f32 %v476, %v477
    %v479 = vrot.slane %v478, 1
    %v480 = vmax.f32 %v478, %v479
    %v481 = vmax.f32 %v381, -1e+30
    %v482 = vmax.f32 %v390, -1e+30
    %v483 = vmax.f32 %v399, -1e+30
    %v484 = vmax.f32 %v408, -1e+30
    %v485 = vmax.f32 %v417, -1e+30
    %v486 = vmax.f32 %v426, -1e+30
    %v487 = vmax.f32 %v435, -1e+30
    %v488 = vmax.f32 %v444, -1e+30
    %v489 = vmax.f32 %v453, -1e+30
    %v490 = vmax.f32 %v462, -1e+30
    %v491 = vmax.f32 %v471, -1e+30
    %v492 = vmax.f32 %v480, -1e+30
    %v495 = vrot.slane %v153, 1
    %v496 = vrot.slane %v153, 2
    %v497 = vrot.slane %v153, 3
    %v498 = vrot.slane %v153, 4
    %v499 = vrot.slane %v153, 5
    %v500 = vrot.slane %v153, 6
    %v501 = vrot.slane %v153, 7
    %v502 = vrot.slane %v156, 1
    %v503 = vrot.slane %v156, 2
    %v504 = vrot.slane %v156, 3
    %v517 = vsub.f32 %v481, %v153
    %v518 = vsub.f32 %v482, %v495
    %v519 = vsub.f32 %v483, %v496
    %v520 = vsub.f32 %v484, %v497
    %v521 = vsub.f32 %v485, %v498
    %v522 = vsub.f32 %v486, %v499
    %v523 = vsub.f32 %v487, %v500
    %v524 = vsub.f32 %v488, %v501
    %v525 = vsub.f32 %v489, %v156
    %v526 = vsub.f32 %v490, %v502
    %v527 = vsub.f32 %v491, %v503
    %v528 = vsub.f32 %v492, %v504
    %v531 = vrot.slane %v210, 1
    %v532 = vrot.slane %v210, 2
    %v533 = vrot.slane %v210, 3
    %v534 = vrot.slane %v210, 4
    %v535 = vrot.slane %v210, 5
    %v536 = vrot.slane %v210, 6
    %v537 = vrot.slane %v210, 7
    %v538 = vrot.slane %v213, 1
    %v539 = vrot.slane %v213, 2
    %v540 = vrot.slane %v213, 3
    %v553 = vadd.f32 %v517, %v210
    %v554 = vadd.f32 %v518, %v531
    %v555 = vadd.f32 %v519, %v532
    %v556 = vadd.f32 %v520, %v533
    %v557 = vadd.f32 %v521, %v534
    %v558 = vadd.f32 %v522, %v535
    %v559 = vadd.f32 %v523, %v536
    %v560 = vadd.f32 %v524, %v537
    %v561 = vadd.f32 %v525, %v213
    %v562 = vadd.f32 %v526, %v538
    %v563 = vadd.f32 %v527, %v539
    %v564 = vadd.f32 %v528, %v540
    %v565 = vld [vmem:[%s4] sm:$0x1]
    %v567 = vlaneseq
    %v568 = vshrl.u32 %v567, 7
    %v569 = vsub.s32 0, %v568
    %v570 = vrot.slane %v565, %v569
    %v572 = vadd.f32 %v553, %v570
    %v573 = vadd.f32 %v554, %v570
    %v574 = vadd.f32 %v555, %v570
    %v575 = vadd.f32 %v556, %v570
    %v576 = vadd.f32 %v557, %v570
    %v577 = vadd.f32 %v558, %v570
    %v578 = vadd.f32 %v559, %v570
    %v579 = vadd.f32 %v560, %v570
    %v580 = vadd.f32 %v561, %v570
    %v581 = vadd.f32 %v562, %v570
    %v582 = vadd.f32 %v563, %v570
    %v583 = vadd.f32 %v564, %v570
    %v584 = vmax.f32 %v572, 0.0
    %v585 = vmax.f32 %v573, 0.0
    %v586 = vmax.f32 %v574, 0.0
    %v587 = vmax.f32 %v575, 0.0
    %v588 = vmax.f32 %v576, 0.0
    %v589 = vmax.f32 %v577, 0.0
    %v590 = vmax.f32 %v578, 0.0
    %v591 = vmax.f32 %v579, 0.0
    %v592 = vmax.f32 %v580, 0.0
    %v593 = vmax.f32 %v581, 0.0
    %v594 = vmax.f32 %v582, 0.0
    %v595 = vmax.f32 %v583, 0.0
    %v596 = vpack.c.bf16 %v584, %v584
    %v597 = vpack.c.bf16 %v585, %v585
    %v598 = vpack.c.bf16 %v586, %v586
    %v599 = vpack.c.bf16 %v587, %v587
    %v600 = vpack.c.bf16 %v588, %v588
    %v601 = vpack.c.bf16 %v589, %v589
    %v602 = vpack.c.bf16 %v590, %v590
    %v603 = vpack.c.bf16 %v591, %v591
    %v604 = vpack.c.bf16 %v592, %v592
    %v605 = vpack.c.bf16 %v593, %v593
    %v606 = vpack.c.bf16 %v594, %v594
    %v607 = vpack.c.bf16 %v595, %v595
    %s608 = scalar_lea.vmem [#allocation7], 16
    %v609 = vld [vmem:[%s608] sm:$0xf]
    %v610 = vld [vmem:[%s608 + $0x4] sm:$0xf]
    %v611 = vld [vmem:[%s608 + $0x8] sm:$0xf]
    %v612 = vld [vmem:[%s608 + $0xc] sm:$0xf]
    %v625 = vunpack.c.l.b16 %v596
    %v626 = vunpack.c.l.b16 %v597
    %v627 = vunpack.c.l.b16 %v598
    %v628 = vunpack.c.l.b16 %v599
    %v629 = vunpack.c.l.b16 %v600
    %v630 = vunpack.c.l.b16 %v601
    %v631 = vunpack.c.l.b16 %v602
    %v632 = vunpack.c.l.b16 %v603
    %v633 = vunpack.c.l.b16 %v604
    %v634 = vunpack.c.l.b16 %v605
    %v635 = vunpack.c.l.b16 %v606
    %v636 = vunpack.c.l.b16 %v607
    %v637 = vrot.slane %v626, 7
    %vm638 = vcmask 1041409
    %v639 = vsel %vm638, %v637, %v625
    %v640 = vrot.slane %v627, 6
    %vm641 = vcmask 1042434
    %v642 = vsel %vm641, %v640, %v639
    %v643 = vrot.slane %v628, 5
    %vm644 = vcmask 1043459
    %v645 = vsel %vm644, %v643, %v642
    %v646 = vrot.slane %v629, 4
    %vm647 = vcmask 1044484
    %v648 = vsel %vm647, %v646, %v645
    %v649 = vrot.slane %v630, 3
    %vm650 = vcmask 1045509
    %v651 = vsel %vm650, %v649, %v648
    %v652 = vrot.slane %v631, 2
    %vm653 = vcmask 1046534
    %v654 = vsel %vm653, %v652, %v651
    %v655 = vrot.slane %v632, 1
    %vm656 = vcmask 1047559
    %v657 = vsel %vm656, %v655, %v654
    %v658 = vrot.slane %v634, 7
    %v659 = vsel %vm638, %v658, %v633
    %v660 = vrot.slane %v635, 6
    %v661 = vsel %vm641, %v660, %v659
    %v662 = vrot.slane %v636, 5
    %v663 = vsel %vm644, %v662, %v661
    %v664 = vpack.c.b16 %v663, %v657
    %v669 = vunpack.c.l.b16 %v609
    %v670 = vunpack.c.l.b16 %v610
    %v671 = vunpack.c.l.b16 %v611
    %v672 = vunpack.c.l.b16 %v612
    %v673 = vpack.c.b16 %v670, %v669
    %v674 = vpack.c.b16 %v672, %v671
    %v678 = vsel %vm114, %v664, 0
    %680 = vmatprep.subr.bf16.mxu0 0
    %681 = vmatpush1.bf16.msra.mxu0 %v673
    %682 = vmatprep.subr.bf16.mxu0 0
    %683 = vmatpush1.bf16.msra.mxu0 %v674
    %684 = vmatprep.subr.bf16.mxu0 0
    %685 = vmatpush1.bf16.msra.mxu0 0
    %686 = vmatprep.subr.bf16.mxu0 0
    %687 = vmatpush1.bf16.msra.mxu0 0
    %688 = vmatprep.subr.bf16.mxu0 0
    %689 = vmatpush1.bf16.msra.mxu0 0
    %690 = vmatprep.subr.bf16.mxu0 0
    %691 = vmatpush1.bf16.msra.mxu0 0
    %692 = vmatprep.subr.bf16.mxu0 0
    %693 = vmatpush1.bf16.msra.mxu0 0
    %694 = vmatprep.subr.bf16.mxu0 0
    %695 = vmatpush1.bf16.msra.mxu0 0
    %696 = vmatprep.subr.bf16.mxu0 0
    %697 = vmatpush1.bf16.msra.mxu0 0
    %698 = vmatprep.subr.bf16.mxu0 0
    %699 = vmatpush1.bf16.msra.mxu0 0
    %700 = vmatprep.subr.bf16.mxu0 0
    %701 = vmatpush1.bf16.msra.mxu0 0
    %702 = vmatprep.subr.bf16.mxu0 0
    %703 = vmatpush1.bf16.msra.mxu0 0
    %704 = vmatprep.subr.bf16.mxu0 0
    %705 = vmatpush1.bf16.msra.mxu0 0
    %706 = vmatprep.subr.bf16.mxu0 0
    %707 = vmatpush1.bf16.msra.mxu0 0
    %708 = vmatprep.subr.bf16.mxu0 0
    %709 = vmatpush1.bf16.msra.mxu0 0
    %710 = vmatprep.subr.bf16.mxu0 0
    %711 = vmatpush1.bf16.msra.mxu0 0
    %712 = vmatprep.mubr.bf16.mxu0 0
    %713 = vmatmul.mubr.bf16.gmra.mrb[0].mxu0 %v678
    %v714 = vpop.f32.mrb[0].mxu0
    %v715 = vadd.f32 0.0, %v714
    %v716 = vpop.f32.mrb[0].mxu0
    %v717 = vpop.f32.mrb[0].mxu0
    %v718 = vadd.f32 0.0, %v717
    %v719 = vpop.f32.mrb[0].mxu0
    %720 = vdwg.mxu0
    %s721 = scalar_lea.vmem [#allocation8], 16
    %v722 = vld [vmem:[%s721] sm:$0xf]
    %v723 = vld [vmem:[%s721 + $0x4] sm:$0xf]
    %v724 = vld [vmem:[%s721 + $0x8] sm:$0xf]
    %v725 = vld [vmem:[%s721 + $0xc] sm:$0xf]
    %v730 = vunpack.c.l.b16 %v722
    %v731 = vunpack.c.l.b16 %v723
    %v732 = vunpack.c.l.b16 %v724
    %v733 = vunpack.c.l.b16 %v725
    %v734 = vpack.c.b16 %v731, %v730
    %v735 = vpack.c.b16 %v733, %v732
    %738 = vmatprep.subr.bf16.mxu0 0
    %739 = vmatpush1.bf16.msra.mxu0 %v734
    %740 = vmatprep.subr.bf16.mxu0 0
    %741 = vmatpush1.bf16.msra.mxu0 %v735
    %742 = vmatprep.subr.bf16.mxu0 0
    %743 = vmatpush1.bf16.msra.mxu0 0
    %744 = vmatprep.subr.bf16.mxu0 0
    %745 = vmatpush1.bf16.msra.mxu0 0
    %746 = vmatprep.subr.bf16.mxu0 0
    %747 = vmatpush1.bf16.msra.mxu0 0
    %748 = vmatprep.subr.bf16.mxu0 0
    %749 = vmatpush1.bf16.msra.mxu0 0
    %750 = vmatprep.subr.bf16.mxu0 0
    %751 = vmatpush1.bf16.msra.mxu0 0
    %752 = vmatprep.subr.bf16.mxu0 0
    %753 = vmatpush1.bf16.msra.mxu0 0
    %754 = vmatprep.subr.bf16.mxu0 0
    %755 = vmatpush1.bf16.msra.mxu0 0
    %756 = vmatprep.subr.bf16.mxu0 0
    %757 = vmatpush1.bf16.msra.mxu0 0
    %758 = vmatprep.subr.bf16.mxu0 0
    %759 = vmatpush1.bf16.msra.mxu0 0
    %760 = vmatprep.subr.bf16.mxu0 0
    %761 = vmatpush1.bf16.msra.mxu0 0
    %762 = vmatprep.subr.bf16.mxu0 0
    %763 = vmatpush1.bf16.msra.mxu0 0
    %764 = vmatprep.subr.bf16.mxu0 0
    %765 = vmatpush1.bf16.msra.mxu0 0
    %766 = vmatprep.subr.bf16.mxu0 0
    %767 = vmatpush1.bf16.msra.mxu0 0
    %768 = vmatprep.subr.bf16.mxu0 0
    %769 = vmatpush1.bf16.msra.mxu0 0
    %770 = vmatprep.mubr.bf16.mxu0 0
    %771 = vmatmul.mubr.bf16.gmra.mrb[0].mxu0 %v678
    %v772 = vpop.f32.mrb[0].mxu0
    %v773 = vadd.f32 0.0, %v772
    %v774 = vpop.f32.mrb[0].mxu0
    %v775 = vpop.f32.mrb[0].mxu0
    %v776 = vadd.f32 0.0, %v775
    %v777 = vpop.f32.mrb[0].mxu0
    %778 = vdwg.mxu0
    %v779 = vadd.f32 %v715, %v222
    %v780 = vadd.f32 %v718, %v226
    %v781 = vadd.f32 %v715, %v233
    %v782 = vadd.f32 %v718, %v237
    %v783 = vadd.f32 %v715, %v244
    %v784 = vadd.f32 %v718, %v248
    %v785 = vadd.f32 %v715, %v255
    %v786 = vadd.f32 %v718, %v259
    %v787 = vadd.f32 %v715, %v266
    %v788 = vadd.f32 %v718, %v270
    %v789 = vadd.f32 %v715, %v277
    %v790 = vadd.f32 %v718, %v281
    %v791 = vadd.f32 %v715, %v288
    %v792 = vadd.f32 %v718, %v292
    %v793 = vadd.f32 %v715, %v299
    %v794 = vadd.f32 %v718, %v303
    %v795 = vadd.f32 %v715, %v310
    %v796 = vadd.f32 %v718, %v314
    %v797 = vadd.f32 %v715, %v321
    %v798 = vadd.f32 %v718, %v325
    %v799 = vadd.f32 %v715, %v332
    %v800 = vadd.f32 %v718, %v336
    %v801 = vadd.f32 %v715, %v343
    %v802 = vadd.f32 %v718, %v347
    %v803 = vsel %vm114, %v779, -inf
    %v804 = vsel %vm373, %v780, -inf
    %v805 = vmax.f32 %v803, %v804
    %v806 = vrot.slane %v805, 4
    %v807 = vmax.f32 %v805, %v806
    %v808 = vrot.slane %v807, 2
    %v809 = vmax.f32 %v807, %v808
    %v810 = vrot.slane %v809, 1
    %v811 = vmax.f32 %v809, %v810
    %v812 = vsel %vm114, %v781, -inf
    %v813 = vsel %vm373, %v782, -inf
    %v814 = vmax.f32 %v812, %v813
    %v815 = vrot.slane %v814, 4
    %v816 = vmax.f32 %v814, %v815
    %v817 = vrot.slane %v816, 2
    %v818 = vmax.f32 %v816, %v817
    %v819 = vrot.slane %v818, 1
    %v820 = vmax.f32 %v818, %v819
    %v821 = vsel %vm114, %v783, -inf
    %v822 = vsel %vm373, %v784, -inf
    %v823 = vmax.f32 %v821, %v822
    %v824 = vrot.slane %v823, 4
    %v825 = vmax.f32 %v823, %v824
    %v826 = vrot.slane %v825, 2
    %v827 = vmax.f32 %v825, %v826
    %v828 = vrot.slane %v827, 1
    %v829 = vmax.f32 %v827, %v828
    %v830 = vsel %vm114, %v785, -inf
    %v831 = vsel %vm373, %v786, -inf
    %v832 = vmax.f32 %v830, %v831
    %v833 = vrot.slane %v832, 4
    %v834 = vmax.f32 %v832, %v833
    %v835 = vrot.slane %v834, 2
    %v836 = vmax.f32 %v834, %v835
    %v837 = vrot.slane %v836, 1
    %v838 = vmax.f32 %v836, %v837
    %v839 = vsel %vm114, %v787, -inf
    %v840 = vsel %vm373, %v788, -inf
    %v841 = vmax.f32 %v839, %v840
    %v842 = vrot.slane %v841, 4
    %v843 = vmax.f32 %v841, %v842
    %v844 = vrot.slane %v843, 2
    %v845 = vmax.f32 %v843, %v844
    %v846 = vrot.slane %v845, 1
    %v847 = vmax.f32 %v845, %v846
    %v848 = vsel %vm114, %v789, -inf
    %v849 = vsel %vm373, %v790, -inf
    %v850 = vmax.f32 %v848, %v849
    %v851 = vrot.slane %v850, 4
    %v852 = vmax.f32 %v850, %v851
    %v853 = vrot.slane %v852, 2
    %v854 = vmax.f32 %v852, %v853
    %v855 = vrot.slane %v854, 1
    %v856 = vmax.f32 %v854, %v855
    %v857 = vsel %vm114, %v791, -inf
    %v858 = vsel %vm373, %v792, -inf
    %v859 = vmax.f32 %v857, %v858
    %v860 = vrot.slane %v859, 4
    %v861 = vmax.f32 %v859, %v860
    %v862 = vrot.slane %v861, 2
    %v863 = vmax.f32 %v861, %v862
    %v864 = vrot.slane %v863, 1
    %v865 = vmax.f32 %v863, %v864
    %v866 = vsel %vm114, %v793, -inf
    %v867 = vsel %vm373, %v794, -inf
    %v868 = vmax.f32 %v866, %v867
    %v869 = vrot.slane %v868, 4
    %v870 = vmax.f32 %v868, %v869
    %v871 = vrot.slane %v870, 2
    %v872 = vmax.f32 %v870, %v871
    %v873 = vrot.slane %v872, 1
    %v874 = vmax.f32 %v872, %v873
    %v875 = vsel %vm114, %v795, -inf
    %v876 = vsel %vm373, %v796, -inf
    %v877 = vmax.f32 %v875, %v876
    %v878 = vrot.slane %v877, 4
    %v879 = vmax.f32 %v877, %v878
    %v880 = vrot.slane %v879, 2
    %v881 = vmax.f32 %v879, %v880
    %v882 = vrot.slane %v881, 1
    %v883 = vmax.f32 %v881, %v882
    %v884 = vsel %vm114, %v797, -inf
    %v885 = vsel %vm373, %v798, -inf
    %v886 = vmax.f32 %v884, %v885
    %v887 = vrot.slane %v886, 4
    %v888 = vmax.f32 %v886, %v887
    %v889 = vrot.slane %v888, 2
    %v890 = vmax.f32 %v888, %v889
    %v891 = vrot.slane %v890, 1
    %v892 = vmax.f32 %v890, %v891
    %v893 = vsel %vm114, %v799, -inf
    %v894 = vsel %vm373, %v800, -inf
    %v895 = vmax.f32 %v893, %v894
    %v896 = vrot.slane %v895, 4
    %v897 = vmax.f32 %v895, %v896
    %v898 = vrot.slane %v897, 2
    %v899 = vmax.f32 %v897, %v898
    %v900 = vrot.slane %v899, 1
    %v901 = vmax.f32 %v899, %v900
    %v902 = vsel %vm114, %v801, -inf
    %v903 = vsel %vm373, %v802, -inf
    %v904 = vmax.f32 %v902, %v903
    %v905 = vrot.slane %v904, 4
    %v906 = vmax.f32 %v904, %v905
    %v907 = vrot.slane %v906, 2
    %v908 = vmax.f32 %v906, %v907
    %v909 = vrot.slane %v908, 1
    %v910 = vmax.f32 %v908, %v909
    %v911 = vmax.f32 %v811, -1e+30
    %v912 = vmax.f32 %v820, -1e+30
    %v913 = vmax.f32 %v829, -1e+30
    %v914 = vmax.f32 %v838, -1e+30
    %v915 = vmax.f32 %v847, -1e+30
    %v916 = vmax.f32 %v856, -1e+30
    %v917 = vmax.f32 %v865, -1e+30
    %v918 = vmax.f32 %v874, -1e+30
    %v919 = vmax.f32 %v883, -1e+30
    %v920 = vmax.f32 %v892, -1e+30
    %v921 = vmax.f32 %v901, -1e+30
    %v922 = vmax.f32 %v910, -1e+30
    %v925 = vrot.slane %v715, 1
    %v926 = vrot.slane %v715, 2
    %v927 = vrot.slane %v715, 3
    %v928 = vrot.slane %v715, 4
    %v929 = vrot.slane %v715, 5
    %v930 = vrot.slane %v715, 6
    %v931 = vrot.slane %v715, 7
    %v932 = vrot.slane %v718, 1
    %v933 = vrot.slane %v718, 2
    %v934 = vrot.slane %v718, 3
    %v947 = vsub.f32 %v911, %v715
    %v948 = vsub.f32 %v912, %v925
    %v949 = vsub.f32 %v913, %v926
    %v950 = vsub.f32 %v914, %v927
    %v951 = vsub.f32 %v915, %v928
    %v952 = vsub.f32 %v916, %v929
    %v953 = vsub.f32 %v917, %v930
    %v954 = vsub.f32 %v918, %v931
    %v955 = vsub.f32 %v919, %v718
    %v956 = vsub.f32 %v920, %v932
    %v957 = vsub.f32 %v921, %v933
    %v958 = vsub.f32 %v922, %v934
    %v961 = vrot.slane %v773, 1
    %v962 = vrot.slane %v773, 2
    %v963 = vrot.slane %v773, 3
    %v964 = vrot.slane %v773, 4
    %v965 = vrot.slane %v773, 5
    %v966 = vrot.slane %v773, 6
    %v967 = vrot.slane %v773, 7
    %v968 = vrot.slane %v776, 1
    %v969 = vrot.slane %v776, 2
    %v970 = vrot.slane %v776, 3
    %v983 = vadd.f32 %v947, %v773
    %v984 = vadd.f32 %v948, %v961
    %v985 = vadd.f32 %v949, %v962
    %v986 = vadd.f32 %v950, %v963
    %v987 = vadd.f32 %v951, %v964
    %v988 = vadd.f32 %v952, %v965
    %v989 = vadd.f32 %v953, %v966
    %v990 = vadd.f32 %v954, %v967
    %v991 = vadd.f32 %v955, %v776
    %v992 = vadd.f32 %v956, %v968
    %v993 = vadd.f32 %v957, %v969
    %v994 = vadd.f32 %v958, %v970
    %s995 = scalar_lea.vmem %s4, 1
    %v996 = vld [vmem:[%s995] sm:$0x1]
    %v998 = vlaneseq
    %v999 = vshrl.u32 %v998, 7
    %v1000 = vsub.s32 0, %v999
    %v1001 = vrot.slane %v996, %v1000
    %v1003 = vadd.f32 %v983, %v1001
    %v1004 = vadd.f32 %v984, %v1001
    %v1005 = vadd.f32 %v985, %v1001
    %v1006 = vadd.f32 %v986, %v1001
    %v1007 = vadd.f32 %v987, %v1001
    %v1008 = vadd.f32 %v988, %v1001
    %v1009 = vadd.f32 %v989, %v1001
    %v1010 = vadd.f32 %v990, %v1001
    %v1011 = vadd.f32 %v991, %v1001
    %v1012 = vadd.f32 %v992, %v1001
    %v1013 = vadd.f32 %v993, %v1001
    %v1014 = vadd.f32 %v994, %v1001
    %v1015 = vmax.f32 %v1003, 0.0
    %v1016 = vmax.f32 %v1004, 0.0
    %v1017 = vmax.f32 %v1005, 0.0
    %v1018 = vmax.f32 %v1006, 0.0
    %v1019 = vmax.f32 %v1007, 0.0
    %v1020 = vmax.f32 %v1008, 0.0
    %v1021 = vmax.f32 %v1009, 0.0
    %v1022 = vmax.f32 %v1010, 0.0
    %v1023 = vmax.f32 %v1011, 0.0
    %v1024 = vmax.f32 %v1012, 0.0
    %v1025 = vmax.f32 %v1013, 0.0
    %v1026 = vmax.f32 %v1014, 0.0
    %v1027 = vpack.c.bf16 %v1015, %v1015
    %v1028 = vpack.c.bf16 %v1016, %v1016
    %v1029 = vpack.c.bf16 %v1017, %v1017
    %v1030 = vpack.c.bf16 %v1018, %v1018
    %v1031 = vpack.c.bf16 %v1019, %v1019
    %v1032 = vpack.c.bf16 %v1020, %v1020
    %v1033 = vpack.c.bf16 %v1021, %v1021
    %v1034 = vpack.c.bf16 %v1022, %v1022
    %v1035 = vpack.c.bf16 %v1023, %v1023
    %v1036 = vpack.c.bf16 %v1024, %v1024
    %v1037 = vpack.c.bf16 %v1025, %v1025
    %v1038 = vpack.c.bf16 %v1026, %v1026
    %s1039 = scalar_lea.vmem [#allocation7], 32
    %v1040 = vld [vmem:[%s1039] sm:$0xf]
    %v1041 = vld [vmem:[%s1039 + $0x4] sm:$0xf]
    %v1042 = vld [vmem:[%s1039 + $0x8] sm:$0xf]
    %v1043 = vld [vmem:[%s1039 + $0xc] sm:$0xf]
    %v1056 = vunpack.c.l.b16 %v1027
    %v1057 = vunpack.c.l.b16 %v1028
    %v1058 = vunpack.c.l.b16 %v1029
    %v1059 = vunpack.c.l.b16 %v1030
    %v1060 = vunpack.c.l.b16 %v1031
    %v1061 = vunpack.c.l.b16 %v1032
    %v1062 = vunpack.c.l.b16 %v1033
    %v1063 = vunpack.c.l.b16 %v1034
    %v1064 = vunpack.c.l.b16 %v1035
    %v1065 = vunpack.c.l.b16 %v1036
    %v1066 = vunpack.c.l.b16 %v1037
    %v1067 = vunpack.c.l.b16 %v1038
    %v1068 = vrot.slane %v1057, 7
    %v1069 = vsel %vm638, %v1068, %v1056
    %v1070 = vrot.slane %v1058, 6
    %v1071 = vsel %vm641, %v1070, %v1069
    %v1072 = vrot.slane %v1059, 5
    %v1073 = vsel %vm644, %v1072, %v1071
    %v1074 = vrot.slane %v1060, 4
    %v1075 = vsel %vm647, %v1074, %v1073
    %v1076 = vrot.slane %v1061, 3
    %v1077 = vsel %vm650, %v1076, %v1075
    %v1078 = vrot.slane %v1062, 2
    %v1079 = vsel %vm653, %v1078, %v1077
    %v1080 = vrot.slane %v1063, 1
    %v1081 = vsel %vm656, %v1080, %v1079
    %v1082 = vrot.slane %v1065, 7
    %v1083 = vsel %vm638, %v1082, %v1064
    %v1084 = vrot.slane %v1066, 6
    %v1085 = vsel %vm641, %v1084, %v1083
    %v1086 = vrot.slane %v1067, 5
    %v1087 = vsel %vm644, %v1086, %v1085
    %v1088 = vpack.c.b16 %v1087, %v1081
    %v1093 = vunpack.c.l.b16 %v1040
    %v1094 = vunpack.c.l.b16 %v1041
    %v1095 = vunpack.c.l.b16 %v1042
    %v1096 = vunpack.c.l.b16 %v1043
    %v1097 = vpack.c.b16 %v1094, %v1093
    %v1098 = vpack.c.b16 %v1096, %v1095
    %v1102 = vsel %vm114, %v1088, 0
    %1104 = vmatprep.subr.bf16.mxu0 0
    %1105 = vmatpush1.bf16.msra.mxu0 %v1097
    %1106 = vmatprep.subr.bf16.mxu0 0
    %1107 = vmatpush1.bf16.msra.mxu0 %v1098
    %1108 = vmatprep.subr.bf16.mxu0 0
    %1109 = vmatpush1.bf16.msra.mxu0 0
    %1110 = vmatprep.subr.bf16.mxu0 0
    %1111 = vmatpush1.bf16.msra.mxu0 0
    %1112 = vmatprep.subr.bf16.mxu0 0
    %1113 = vmatpush1.bf16.msra.mxu0 0
    %1114 = vmatprep.subr.bf16.mxu0 0
    %1115 = vmatpush1.bf16.msra.mxu0 0
    %1116 = vmatprep.subr.bf16.mxu0 0
    %1117 = vmatpush1.bf16.msra.mxu0 0
    %1118 = vmatprep.subr.bf16.mxu0 0
    %1119 = vmatpush1.bf16.msra.mxu0 0
    %1120 = vmatprep.subr.bf16.mxu0 0
    %1121 = vmatpush1.bf16.msra.mxu0 0
    %1122 = vmatprep.subr.bf16.mxu0 0
    %1123 = vmatpush1.bf16.msra.mxu0 0
    %1124 = vmatprep.subr.bf16.mxu0 0
    %1125 = vmatpush1.bf16.msra.mxu0 0
    %1126 = vmatprep.subr.bf16.mxu0 0
    %1127 = vmatpush1.bf16.msra.mxu0 0
    %1128 = vmatprep.subr.bf16.mxu0 0
    %1129 = vmatpush1.bf16.msra.mxu0 0
    %1130 = vmatprep.subr.bf16.mxu0 0
    %1131 = vmatpush1.bf16.msra.mxu0 0
    %1132 = vmatprep.subr.bf16.mxu0 0
    %1133 = vmatpush1.bf16.msra.mxu0 0
    %1134 = vmatprep.subr.bf16.mxu0 0
    %1135 = vmatpush1.bf16.msra.mxu0 0
    %1136 = vmatprep.mubr.bf16.mxu0 0
    %1137 = vmatmul.mubr.bf16.gmra.mrb[0].mxu0 %v1102
    %v1138 = vpop.f32.mrb[0].mxu0
    %v1139 = vadd.f32 0.0, %v1138
    %v1140 = vpop.f32.mrb[0].mxu0
    %v1141 = vpop.f32.mrb[0].mxu0
    %v1142 = vadd.f32 0.0, %v1141
    %v1143 = vpop.f32.mrb[0].mxu0
    %1144 = vdwg.mxu0
    %s1145 = scalar_lea.vmem [#allocation8], 32
    %v1146 = vld [vmem:[%s1145] sm:$0xf]
    %v1147 = vld [vmem:[%s1145 + $0x4] sm:$0xf]
    %v1148 = vld [vmem:[%s1145 + $0x8] sm:$0xf]
    %v1149 = vld [vmem:[%s1145 + $0xc] sm:$0xf]
    %v1154 = vunpack.c.l.b16 %v1146
    %v1155 = vunpack.c.l.b16 %v1147
    %v1156 = vunpack.c.l.b16 %v1148
    %v1157 = vunpack.c.l.b16 %v1149
    %v1158 = vpack.c.b16 %v1155, %v1154
    %v1159 = vpack.c.b16 %v1157, %v1156
    %1162 = vmatprep.subr.bf16.mxu0 0
    %1163 = vmatpush1.bf16.msra.mxu0 %v1158
    %1164 = vmatprep.subr.bf16.mxu0 0
    %1165 = vmatpush1.bf16.msra.mxu0 %v1159
    %1166 = vmatprep.subr.bf16.mxu0 0
    %1167 = vmatpush1.bf16.msra.mxu0 0
    %1168 = vmatprep.subr.bf16.mxu0 0
    %1169 = vmatpush1.bf16.msra.mxu0 0
    %1170 = vmatprep.subr.bf16.mxu0 0
    %1171 = vmatpush1.bf16.msra.mxu0 0
    %1172 = vmatprep.subr.bf16.mxu0 0
    %1173 = vmatpush1.bf16.msra.mxu0 0
    %1174 = vmatprep.subr.bf16.mxu0 0
    %1175 = vmatpush1.bf16.msra.mxu0 0
    %1176 = vmatprep.subr.bf16.mxu0 0
    %1177 = vmatpush1.bf16.msra.mxu0 0
    %1178 = vmatprep.subr.bf16.mxu0 0
    %1179 = vmatpush1.bf16.msra.mxu0 0
    %1180 = vmatprep.subr.bf16.mxu0 0
    %1181 = vmatpush1.bf16.msra.mxu0 0
    %1182 = vmatprep.subr.bf16.mxu0 0
    %1183 = vmatpush1.bf16.msra.mxu0 0
    %1184 = vmatprep.subr.bf16.mxu0 0
    %1185 = vmatpush1.bf16.msra.mxu0 0
    %1186 = vmatprep.subr.bf16.mxu0 0
    %1187 = vmatpush1.bf16.msra.mxu0 0
    %1188 = vmatprep.subr.bf16.mxu0 0
    %1189 = vmatpush1.bf16.msra.mxu0 0
    %1190 = vmatprep.subr.bf16.mxu0 0
    %1191 = vmatpush1.bf16.msra.mxu0 0
    %1192 = vmatprep.subr.bf16.mxu0 0
    %1193 = vmatpush1.bf16.msra.mxu0 0
    %1194 = vmatprep.mubr.bf16.mxu0 0
    %1195 = vmatmul.mubr.bf16.gmra.mrb[0].mxu0 %v1102
    %v1196 = vpop.f32.mrb[0].mxu0
    %v1197 = vadd.f32 0.0, %v1196
    %v1198 = vpop.f32.mrb[0].mxu0
    %v1199 = vpop.f32.mrb[0].mxu0
    %v1200 = vadd.f32 0.0, %v1199
    %v1201 = vpop.f32.mrb[0].mxu0
    %1202 = vdwg.mxu0
    %v1203 = vadd.f32 %v1139, %v222
    %v1204 = vadd.f32 %v1142, %v226
    %v1205 = vadd.f32 %v1139, %v233
    %v1206 = vadd.f32 %v1142, %v237
    %v1207 = vadd.f32 %v1139, %v244
    %v1208 = vadd.f32 %v1142, %v248
    %v1209 = vadd.f32 %v1139, %v255
    %v1210 = vadd.f32 %v1142, %v259
    %v1211 = vadd.f32 %v1139, %v266
    %v1212 = vadd.f32 %v1142, %v270
    %v1213 = vadd.f32 %v1139, %v277
    %v1214 = vadd.f32 %v1142, %v281
    %v1215 = vadd.f32 %v1139, %v288
    %v1216 = vadd.f32 %v1142, %v292
    %v1217 = vadd.f32 %v1139, %v299
    %v1218 = vadd.f32 %v1142, %v303
    %v1219 = vadd.f32 %v1139, %v310
    %v1220 = vadd.f32 %v1142, %v314
    %v1221 = vadd.f32 %v1139, %v321
    %v1222 = vadd.f32 %v1142, %v325
    %v1223 = vadd.f32 %v1139, %v332
    %v1224 = vadd.f32 %v1142, %v336
    %v1225 = vadd.f32 %v1139, %v343
    %v1226 = vadd.f32 %v1142, %v347
    %v1227 = vsel %vm114, %v1203, -inf
    %v1228 = vsel %vm373, %v1204, -inf
    %v1229 = vmax.f32 %v1227, %v1228
    %v1230 = vrot.slane %v1229, 4
    %v1231 = vmax.f32 %v1229, %v1230
    %v1232 = vrot.slane %v1231, 2
    %v1233 = vmax.f32 %v1231, %v1232
    %v1234 = vrot.slane %v1233, 1
    %v1235 = vmax.f32 %v1233, %v1234
    %v1236 = vsel %vm114, %v1205, -inf
    %v1237 = vsel %vm373, %v1206, -inf
    %v1238 = vmax.f32 %v1236, %v1237
    %v1239 = vrot.slane %v1238, 4
    %v1240 = vmax.f32 %v1238, %v1239
    %v1241 = vrot.slane %v1240, 2
    %v1242 = vmax.f32 %v1240, %v1241
    %v1243 = vrot.slane %v1242, 1
    %v1244 = vmax.f32 %v1242, %v1243
    %v1245 = vsel %vm114, %v1207, -inf
    %v1246 = vsel %vm373, %v1208, -inf
    %v1247 = vmax.f32 %v1245, %v1246
    %v1248 = vrot.slane %v1247, 4
    %v1249 = vmax.f32 %v1247, %v1248
    %v1250 = vrot.slane %v1249, 2
    %v1251 = vmax.f32 %v1249, %v1250
    %v1252 = vrot.slane %v1251, 1
    %v1253 = vmax.f32 %v1251, %v1252
    %v1254 = vsel %vm114, %v1209, -inf
    %v1255 = vsel %vm373, %v1210, -inf
    %v1256 = vmax.f32 %v1254, %v1255
    %v1257 = vrot.slane %v1256, 4
    %v1258 = vmax.f32 %v1256, %v1257
    %v1259 = vrot.slane %v1258, 2
    %v1260 = vmax.f32 %v1258, %v1259
    %v1261 = vrot.slane %v1260, 1
    %v1262 = vmax.f32 %v1260, %v1261
    %v1263 = vsel %vm114, %v1211, -inf
    %v1264 = vsel %vm373, %v1212, -inf
    %v1265 = vmax.f32 %v1263, %v1264
    %v1266 = vrot.slane %v1265, 4
    %v1267 = vmax.f32 %v1265, %v1266
    %v1268 = vrot.slane %v1267, 2
    %v1269 = vmax.f32 %v1267, %v1268
    %v1270 = vrot.slane %v1269, 1
    %v1271 = vmax.f32 %v1269, %v1270
    %v1272 = vsel %vm114, %v1213, -inf
    %v1273 = vsel %vm373, %v1214, -inf
    %v1274 = vmax.f32 %v1272, %v1273
    %v1275 = vrot.slane %v1274, 4
    %v1276 = vmax.f32 %v1274, %v1275
    %v1277 = vrot.slane %v1276, 2
    %v1278 = vmax.f32 %v1276, %v1277
    %v1279 = vrot.slane %v1278, 1
    %v1280 = vmax.f32 %v1278, %v1279
    %v1281 = vsel %vm114, %v1215, -inf
    %v1282 = vsel %vm373, %v1216, -inf
    %v1283 = vmax.f32 %v1281, %v1282
    %v1284 = vrot.slane %v1283, 4
    %v1285 = vmax.f32 %v1283, %v1284
    %v1286 = vrot.slane %v1285, 2
    %v1287 = vmax.f32 %v1285, %v1286
    %v1288 = vrot.slane %v1287, 1
    %v1289 = vmax.f32 %v1287, %v1288
    %v1290 = vsel %vm114, %v1217, -inf
    %v1291 = vsel %vm373, %v1218, -inf
    %v1292 = vmax.f32 %v1290, %v1291
    %v1293 = vrot.slane %v1292, 4
    %v1294 = vmax.f32 %v1292, %v1293
    %v1295 = vrot.slane %v1294, 2
    %v1296 = vmax.f32 %v1294, %v1295
    %v1297 = vrot.slane %v1296, 1
    %v1298 = vmax.f32 %v1296, %v1297
    %v1299 = vsel %vm114, %v1219, -inf
    %v1300 = vsel %vm373, %v1220, -inf
    %v1301 = vmax.f32 %v1299, %v1300
    %v1302 = vrot.slane %v1301, 4
    %v1303 = vmax.f32 %v1301, %v1302
    %v1304 = vrot.slane %v1303, 2
    %v1305 = vmax.f32 %v1303, %v1304
    %v1306 = vrot.slane %v1305, 1
    %v1307 = vmax.f32 %v1305, %v1306
    %v1308 = vsel %vm114, %v1221, -inf
    %v1309 = vsel %vm373, %v1222, -inf
    %v1310 = vmax.f32 %v1308, %v1309
    %v1311 = vrot.slane %v1310, 4
    %v1312 = vmax.f32 %v1310, %v1311
    %v1313 = vrot.slane %v1312, 2
    %v1314 = vmax.f32 %v1312, %v1313
    %v1315 = vrot.slane %v1314, 1
    %v1316 = vmax.f32 %v1314, %v1315
    %v1317 = vsel %vm114, %v1223, -inf
    %v1318 = vsel %vm373, %v1224, -inf
    %v1319 = vmax.f32 %v1317, %v1318
    %v1320 = vrot.slane %v1319, 4
    %v1321 = vmax.f32 %v1319, %v1320
    %v1322 = vrot.slane %v1321, 2
    %v1323 = vmax.f32 %v1321, %v1322
    %v1324 = vrot.slane %v1323, 1
    %v1325 = vmax.f32 %v1323, %v1324
    %v1326 = vsel %vm114, %v1225, -inf
    %v1327 = vsel %vm373, %v1226, -inf
    %v1328 = vmax.f32 %v1326, %v1327
    %v1329 = vrot.slane %v1328, 4
    %v1330 = vmax.f32 %v1328, %v1329
    %v1331 = vrot.slane %v1330, 2
    %v1332 = vmax.f32 %v1330, %v1331
    %v1333 = vrot.slane %v1332, 1
    %v1334 = vmax.f32 %v1332, %v1333
    %v1335 = vmax.f32 %v1235, -1e+30
    %v1336 = vmax.f32 %v1244, -1e+30
    %v1337 = vmax.f32 %v1253, -1e+30
    %v1338 = vmax.f32 %v1262, -1e+30
    %v1339 = vmax.f32 %v1271, -1e+30
    %v1340 = vmax.f32 %v1280, -1e+30
    %v1341 = vmax.f32 %v1289, -1e+30
    %v1342 = vmax.f32 %v1298, -1e+30
    %v1343 = vmax.f32 %v1307, -1e+30
    %v1344 = vmax.f32 %v1316, -1e+30
    %v1345 = vmax.f32 %v1325, -1e+30
    %v1346 = vmax.f32 %v1334, -1e+30
    %v1349 = vrot.slane %v1139, 1
    %v1350 = vrot.slane %v1139, 2
    %v1351 = vrot.slane %v1139, 3
    %v1352 = vrot.slane %v1139, 4
    %v1353 = vrot.slane %v1139, 5
    %v1354 = vrot.slane %v1139, 6
    %v1355 = vrot.slane %v1139, 7
    %v1356 = vrot.slane %v1142, 1
    %v1357 = vrot.slane %v1142, 2
    %v1358 = vrot.slane %v1142, 3
    %v1371 = vsub.f32 %v1335, %v1139
    %v1372 = vsub.f32 %v1336, %v1349
    %v1373 = vsub.f32 %v1337, %v1350
    %v1374 = vsub.f32 %v1338, %v1351
    %v1375 = vsub.f32 %v1339, %v1352
    %v1376 = vsub.f32 %v1340, %v1353
    %v1377 = vsub.f32 %v1341, %v1354
    %v1378 = vsub.f32 %v1342, %v1355
    %v1379 = vsub.f32 %v1343, %v1142
    %v1380 = vsub.f32 %v1344, %v1356
    %v1381 = vsub.f32 %v1345, %v1357
    %v1382 = vsub.f32 %v1346, %v1358
    %v1385 = vrot.slane %v1197, 1
    %v1386 = vrot.slane %v1197, 2
    %v1387 = vrot.slane %v1197, 3
    %v1388 = vrot.slane %v1197, 4
    %v1389 = vrot.slane %v1197, 5
    %v1390 = vrot.slane %v1197, 6
    %v1391 = vrot.slane %v1197, 7
    %v1392 = vrot.slane %v1200, 1
    %v1393 = vrot.slane %v1200, 2
    %v1394 = vrot.slane %v1200, 3
    %v1407 = vadd.f32 %v1371, %v1197
    %v1408 = vadd.f32 %v1372, %v1385
    %v1409 = vadd.f32 %v1373, %v1386
    %v1410 = vadd.f32 %v1374, %v1387
    %v1411 = vadd.f32 %v1375, %v1388
    %v1412 = vadd.f32 %v1376, %v1389
    %v1413 = vadd.f32 %v1377, %v1390
    %v1414 = vadd.f32 %v1378, %v1391
    %v1415 = vadd.f32 %v1379, %v1200
    %v1416 = vadd.f32 %v1380, %v1392
    %v1417 = vadd.f32 %v1381, %v1393
    %v1418 = vadd.f32 %v1382, %v1394
    %s1419 = scalar_lea.vmem %s4, 2
    %v1420 = vld [vmem:[%s1419] sm:$0x1]
    %v1422 = vlaneseq
    %v1423 = vshrl.u32 %v1422, 7
    %v1424 = vsub.s32 0, %v1423
    %v1425 = vrot.slane %v1420, %v1424
    %v1427 = vadd.f32 %v1407, %v1425
    %v1428 = vadd.f32 %v1408, %v1425
    %v1429 = vadd.f32 %v1409, %v1425
    %v1430 = vadd.f32 %v1410, %v1425
    %v1431 = vadd.f32 %v1411, %v1425
    %v1432 = vadd.f32 %v1412, %v1425
    %v1433 = vadd.f32 %v1413, %v1425
    %v1434 = vadd.f32 %v1414, %v1425
    %v1435 = vadd.f32 %v1415, %v1425
    %v1436 = vadd.f32 %v1416, %v1425
    %v1437 = vadd.f32 %v1417, %v1425
    %v1438 = vadd.f32 %v1418, %v1425
    %v1439 = vmax.f32 %v1427, 0.0
    %v1440 = vmax.f32 %v1428, 0.0
    %v1441 = vmax.f32 %v1429, 0.0
    %v1442 = vmax.f32 %v1430, 0.0
    %v1443 = vmax.f32 %v1431, 0.0
    %v1444 = vmax.f32 %v1432, 0.0
    %v1445 = vmax.f32 %v1433, 0.0
    %v1446 = vmax.f32 %v1434, 0.0
    %v1447 = vmax.f32 %v1435, 0.0
    %v1448 = vmax.f32 %v1436, 0.0
    %v1449 = vmax.f32 %v1437, 0.0
    %v1450 = vmax.f32 %v1438, 0.0
    %v1451 = vpack.c.bf16 %v1439, %v1439
    %v1452 = vpack.c.bf16 %v1440, %v1440
    %v1453 = vpack.c.bf16 %v1441, %v1441
    %v1454 = vpack.c.bf16 %v1442, %v1442
    %v1455 = vpack.c.bf16 %v1443, %v1443
    %v1456 = vpack.c.bf16 %v1444, %v1444
    %v1457 = vpack.c.bf16 %v1445, %v1445
    %v1458 = vpack.c.bf16 %v1446, %v1446
    %v1459 = vpack.c.bf16 %v1447, %v1447
    %v1460 = vpack.c.bf16 %v1448, %v1448
    %v1461 = vpack.c.bf16 %v1449, %v1449
    %v1462 = vpack.c.bf16 %v1450, %v1450
    %s1463 = scalar_lea.vmem [#allocation7], 48
    %v1464 = vld [vmem:[%s1463] sm:$0xf]
    %v1465 = vld [vmem:[%s1463 + $0x4] sm:$0xf]
    %v1466 = vld [vmem:[%s1463 + $0x8] sm:$0xf]
    %v1467 = vld [vmem:[%s1463 + $0xc] sm:$0xf]
    %v1480 = vunpack.c.l.b16 %v1451
    %v1481 = vunpack.c.l.b16 %v1452
    %v1482 = vunpack.c.l.b16 %v1453
    %v1483 = vunpack.c.l.b16 %v1454
    %v1484 = vunpack.c.l.b16 %v1455
    %v1485 = vunpack.c.l.b16 %v1456
    %v1486 = vunpack.c.l.b16 %v1457
    %v1487 = vunpack.c.l.b16 %v1458
    %v1488 = vunpack.c.l.b16 %v1459
    %v1489 = vunpack.c.l.b16 %v1460
    %v1490 = vunpack.c.l.b16 %v1461
    %v1491 = vunpack.c.l.b16 %v1462
    %v1492 = vrot.slane %v1481, 7
    %v1493 = vsel %vm638, %v1492, %v1480
    %v1494 = vrot.slane %v1482, 6
    %v1495 = vsel %vm641, %v1494, %v1493
    %v1496 = vrot.slane %v1483, 5
    %v1497 = vsel %vm644, %v1496, %v1495
    %v1498 = vrot.slane %v1484, 4
    %v1499 = vsel %vm647, %v1498, %v1497
    %v1500 = vrot.slane %v1485, 3
    %v1501 = vsel %vm650, %v1500, %v1499
    %v1502 = vrot.slane %v1486, 2
    %v1503 = vsel %vm653, %v1502, %v1501
    %v1504 = vrot.slane %v1487, 1
    %v1505 = vsel %vm656, %v1504, %v1503
    %v1506 = vrot.slane %v1489, 7
    %v1507 = vsel %vm638, %v1506, %v1488
    %v1508 = vrot.slane %v1490, 6
    %v1509 = vsel %vm641, %v1508, %v1507
    %v1510 = vrot.slane %v1491, 5
    %v1511 = vsel %vm644, %v1510, %v1509
    %v1512 = vpack.c.b16 %v1511, %v1505
    %v1517 = vunpack.c.l.b16 %v1464
    %v1518 = vunpack.c.l.b16 %v1465
    %v1519 = vunpack.c.l.b16 %v1466
    %v1520 = vunpack.c.l.b16 %v1467
    %v1521 = vpack.c.b16 %v1518, %v1517
    %v1522 = vpack.c.b16 %v1520, %v1519
    %v1526 = vsel %vm114, %v1512, 0
    %1528 = vmatprep.subr.bf16.mxu0 0
    %1529 = vmatpush1.bf16.msra.mxu0 %v1521
    %1530 = vmatprep.subr.bf16.mxu0 0
    %1531 = vmatpush1.bf16.msra.mxu0 %v1522
    %1532 = vmatprep.subr.bf16.mxu0 0
    %1533 = vmatpush1.bf16.msra.mxu0 0
    %1534 = vmatprep.subr.bf16.mxu0 0
    %1535 = vmatpush1.bf16.msra.mxu0 0
    %1536 = vmatprep.subr.bf16.mxu0 0
    %1537 = vmatpush1.bf16.msra.mxu0 0
    %1538 = vmatprep.subr.bf16.mxu0 0
    %1539 = vmatpush1.bf16.msra.mxu0 0
    %1540 = vmatprep.subr.bf16.mxu0 0
    %1541 = vmatpush1.bf16.msra.mxu0 0
    %1542 = vmatprep.subr.bf16.mxu0 0
    %1543 = vmatpush1.bf16.msra.mxu0 0
    %1544 = vmatprep.subr.bf16.mxu0 0
    %1545 = vmatpush1.bf16.msra.mxu0 0
    %1546 = vmatprep.subr.bf16.mxu0 0
    %1547 = vmatpush1.bf16.msra.mxu0 0
    %1548 = vmatprep.subr.bf16.mxu0 0
    %1549 = vmatpush1.bf16.msra.mxu0 0
    %1550 = vmatprep.subr.bf16.mxu0 0
    %1551 = vmatpush1.bf16.msra.mxu0 0
    %1552 = vmatprep.subr.bf16.mxu0 0
    %1553 = vmatpush1.bf16.msra.mxu0 0
    %1554 = vmatprep.subr.bf16.mxu0 0
    %1555 = vmatpush1.bf16.msra.mxu0 0
    %1556 = vmatprep.subr.bf16.mxu0 0
    %1557 = vmatpush1.bf16.msra.mxu0 0
    %1558 = vmatprep.subr.bf16.mxu0 0
    %1559 = vmatpush1.bf16.msra.mxu0 0
    %1560 = vmatprep.mubr.bf16.mxu0 0
    %1561 = vmatmul.mubr.bf16.gmra.mrb[0].mxu0 %v1526
    %v1562 = vpop.f32.mrb[0].mxu0
    %v1563 = vadd.f32 0.0, %v1562
    %v1564 = vpop.f32.mrb[0].mxu0
    %v1565 = vpop.f32.mrb[0].mxu0
    %v1566 = vadd.f32 0.0, %v1565
    %v1567 = vpop.f32.mrb[0].mxu0
    %1568 = vdwg.mxu0
    %s1569 = scalar_lea.vmem [#allocation8], 48
    %v1570 = vld [vmem:[%s1569] sm:$0xf]
    %v1571 = vld [vmem:[%s1569 + $0x4] sm:$0xf]
    %v1572 = vld [vmem:[%s1569 + $0x8] sm:$0xf]
    %v1573 = vld [vmem:[%s1569 + $0xc] sm:$0xf]
    %v1578 = vunpack.c.l.b16 %v1570
    %v1579 = vunpack.c.l.b16 %v1571
    %v1580 = vunpack.c.l.b16 %v1572
    %v1581 = vunpack.c.l.b16 %v1573
    %v1582 = vpack.c.b16 %v1579, %v1578
    %v1583 = vpack.c.b16 %v1581, %v1580
    %1586 = vmatprep.subr.bf16.mxu0 0
    %1587 = vmatpush1.bf16.msra.mxu0 %v1582
    %1588 = vmatprep.subr.bf16.mxu0 0
    %1589 = vmatpush1.bf16.msra.mxu0 %v1583
    %1590 = vmatprep.subr.bf16.mxu0 0
    %1591 = vmatpush1.bf16.msra.mxu0 0
    %1592 = vmatprep.subr.bf16.mxu0 0
    %1593 = vmatpush1.bf16.msra.mxu0 0
    %1594 = vmatprep.subr.bf16.mxu0 0
    %1595 = vmatpush1.bf16.msra.mxu0 0
    %1596 = vmatprep.subr.bf16.mxu0 0
    %1597 = vmatpush1.bf16.msra.mxu0 0
    %1598 = vmatprep.subr.bf16.mxu0 0
    %1599 = vmatpush1.bf16.msra.mxu0 0
    %1600 = vmatprep.subr.bf16.mxu0 0
    %1601 = vmatpush1.bf16.msra.mxu0 0
    %1602 = vmatprep.subr.bf16.mxu0 0
    %1603 = vmatpush1.bf16.msra.mxu0 0
    %1604 = vmatprep.subr.bf16.mxu0 0
    %1605 = vmatpush1.bf16.msra.mxu0 0
    %1606 = vmatprep.subr.bf16.mxu0 0
    %1607 = vmatpush1.bf16.msra.mxu0 0
    %1608 = vmatprep.subr.bf16.mxu0 0
    %1609 = vmatpush1.bf16.msra.mxu0 0
    %1610 = vmatprep.subr.bf16.mxu0 0
    %1611 = vmatpush1.bf16.msra.mxu0 0
    %1612 = vmatprep.subr.bf16.mxu0 0
    %1613 = vmatpush1.bf16.msra.mxu0 0
    %1614 = vmatprep.subr.bf16.mxu0 0
    %1615 = vmatpush1.bf16.msra.mxu0 0
    %1616 = vmatprep.subr.bf16.mxu0 0
    %1617 = vmatpush1.bf16.msra.mxu0 0
    %1618 = vmatprep.mubr.bf16.mxu0 0
    %1619 = vmatmul.mubr.bf16.gmra.mrb[0].mxu0 %v1526
    %v1620 = vpop.f32.mrb[0].mxu0
    %v1621 = vadd.f32 0.0, %v1620
    %v1622 = vpop.f32.mrb[0].mxu0
    %v1623 = vpop.f32.mrb[0].mxu0
    %v1624 = vadd.f32 0.0, %v1623
    %v1625 = vpop.f32.mrb[0].mxu0
    %1626 = vdwg.mxu0
    %v1627 = vadd.f32 %v1563, %v222
    %v1628 = vadd.f32 %v1566, %v226
    %v1629 = vadd.f32 %v1563, %v233
    %v1630 = vadd.f32 %v1566, %v237
    %v1631 = vadd.f32 %v1563, %v244
    %v1632 = vadd.f32 %v1566, %v248
    %v1633 = vadd.f32 %v1563, %v255
    %v1634 = vadd.f32 %v1566, %v259
    %v1635 = vadd.f32 %v1563, %v266
    %v1636 = vadd.f32 %v1566, %v270
    %v1637 = vadd.f32 %v1563, %v277
    %v1638 = vadd.f32 %v1566, %v281
    %v1639 = vadd.f32 %v1563, %v288
    %v1640 = vadd.f32 %v1566, %v292
    %v1641 = vadd.f32 %v1563, %v299
    %v1642 = vadd.f32 %v1566, %v303
    %v1643 = vadd.f32 %v1563, %v310
    %v1644 = vadd.f32 %v1566, %v314
    %v1645 = vadd.f32 %v1563, %v321
    %v1646 = vadd.f32 %v1566, %v325
    %v1647 = vadd.f32 %v1563, %v332
    %v1648 = vadd.f32 %v1566, %v336
    %v1649 = vadd.f32 %v1563, %v343
    %v1650 = vadd.f32 %v1566, %v347
    %v1651 = vsel %vm114, %v1627, -inf
    %v1652 = vsel %vm373, %v1628, -inf
    %v1653 = vmax.f32 %v1651, %v1652
    %v1654 = vrot.slane %v1653, 4
    %v1655 = vmax.f32 %v1653, %v1654
    %v1656 = vrot.slane %v1655, 2
    %v1657 = vmax.f32 %v1655, %v1656
    %v1658 = vrot.slane %v1657, 1
    %v1659 = vmax.f32 %v1657, %v1658
    %v1660 = vsel %vm114, %v1629, -inf
    %v1661 = vsel %vm373, %v1630, -inf
    %v1662 = vmax.f32 %v1660, %v1661
    %v1663 = vrot.slane %v1662, 4
    %v1664 = vmax.f32 %v1662, %v1663
    %v1665 = vrot.slane %v1664, 2
    %v1666 = vmax.f32 %v1664, %v1665
    %v1667 = vrot.slane %v1666, 1
    %v1668 = vmax.f32 %v1666, %v1667
    %v1669 = vsel %vm114, %v1631, -inf
    %v1670 = vsel %vm373, %v1632, -inf
    %v1671 = vmax.f32 %v1669, %v1670
    %v1672 = vrot.slane %v1671, 4
    %v1673 = vmax.f32 %v1671, %v1672
    %v1674 = vrot.slane %v1673, 2
    %v1675 = vmax.f32 %v1673, %v1674
    %v1676 = vrot.slane %v1675, 1
    %v1677 = vmax.f32 %v1675, %v1676
    %v1678 = vsel %vm114, %v1633, -inf
    %v1679 = vsel %vm373, %v1634, -inf
    %v1680 = vmax.f32 %v1678, %v1679
    %v1681 = vrot.slane %v1680, 4
    %v1682 = vmax.f32 %v1680, %v1681
    %v1683 = vrot.slane %v1682, 2
    %v1684 = vmax.f32 %v1682, %v1683
    %v1685 = vrot.slane %v1684, 1
    %v1686 = vmax.f32 %v1684, %v1685
    %v1687 = vsel %vm114, %v1635, -inf
    %v1688 = vsel %vm373, %v1636, -inf
    %v1689 = vmax.f32 %v1687, %v1688
    %v1690 = vrot.slane %v1689, 4
    %v1691 = vmax.f32 %v1689, %v1690
    %v1692 = vrot.slane %v1691, 2
    %v1693 = vmax.f32 %v1691, %v1692
    %v1694 = vrot.slane %v1693, 1
    %v1695 = vmax.f32 %v1693, %v1694
    %v1696 = vsel %vm114, %v1637, -inf
    %v1697 = vsel %vm373, %v1638, -inf
    %v1698 = vmax.f32 %v1696, %v1697
    %v1699 = vrot.slane %v1698, 4
    %v1700 = vmax.f32 %v1698, %v1699
    %v1701 = vrot.slane %v1700, 2
    %v1702 = vmax.f32 %v1700, %v1701
    %v1703 = vrot.slane %v1702, 1
    %v1704 = vmax.f32 %v1702, %v1703
    %v1705 = vsel %vm114, %v1639, -inf
    %v1706 = vsel %vm373, %v1640, -inf
    %v1707 = vmax.f32 %v1705, %v1706
    %v1708 = vrot.slane %v1707, 4
    %v1709 = vmax.f32 %v1707, %v1708
    %v1710 = vrot.slane %v1709, 2
    %v1711 = vmax.f32 %v1709, %v1710
    %v1712 = vrot.slane %v1711, 1
    %v1713 = vmax.f32 %v1711, %v1712
    %v1714 = vsel %vm114, %v1641, -inf
    %v1715 = vsel %vm373, %v1642, -inf
    %v1716 = vmax.f32 %v1714, %v1715
    %v1717 = vrot.slane %v1716, 4
    %v1718 = vmax.f32 %v1716, %v1717
    %v1719 = vrot.slane %v1718, 2
    %v1720 = vmax.f32 %v1718, %v1719
    %v1721 = vrot.slane %v1720, 1
    %v1722 = vmax.f32 %v1720, %v1721
    %v1723 = vsel %vm114, %v1643, -inf
    %v1724 = vsel %vm373, %v1644, -inf
    %v1725 = vmax.f32 %v1723, %v1724
    %v1726 = vrot.slane %v1725, 4
    %v1727 = vmax.f32 %v1725, %v1726
    %v1728 = vrot.slane %v1727, 2
    %v1729 = vmax.f32 %v1727, %v1728
    %v1730 = vrot.slane %v1729, 1
    %v1731 = vmax.f32 %v1729, %v1730
    %v1732 = vsel %vm114, %v1645, -inf
    %v1733 = vsel %vm373, %v1646, -inf
    %v1734 = vmax.f32 %v1732, %v1733
    %v1735 = vrot.slane %v1734, 4
    %v1736 = vmax.f32 %v1734, %v1735
    %v1737 = vrot.slane %v1736, 2
    %v1738 = vmax.f32 %v1736, %v1737
    %v1739 = vrot.slane %v1738, 1
    %v1740 = vmax.f32 %v1738, %v1739
    %v1741 = vsel %vm114, %v1647, -inf
    %v1742 = vsel %vm373, %v1648, -inf
    %v1743 = vmax.f32 %v1741, %v1742
    %v1744 = vrot.slane %v1743, 4
    %v1745 = vmax.f32 %v1743, %v1744
    %v1746 = vrot.slane %v1745, 2
    %v1747 = vmax.f32 %v1745, %v1746
    %v1748 = vrot.slane %v1747, 1
    %v1749 = vmax.f32 %v1747, %v1748
    %v1750 = vsel %vm114, %v1649, -inf
    %v1751 = vsel %vm373, %v1650, -inf
    %v1752 = vmax.f32 %v1750, %v1751
    %v1753 = vrot.slane %v1752, 4
    %v1754 = vmax.f32 %v1752, %v1753
    %v1755 = vrot.slane %v1754, 2
    %v1756 = vmax.f32 %v1754, %v1755
    %v1757 = vrot.slane %v1756, 1
    %v1758 = vmax.f32 %v1756, %v1757
    %v1759 = vmax.f32 %v1659, -1e+30
    %v1760 = vmax.f32 %v1668, -1e+30
    %v1761 = vmax.f32 %v1677, -1e+30
    %v1762 = vmax.f32 %v1686, -1e+30
    %v1763 = vmax.f32 %v1695, -1e+30
    %v1764 = vmax.f32 %v1704, -1e+30
    %v1765 = vmax.f32 %v1713, -1e+30
    %v1766 = vmax.f32 %v1722, -1e+30
    %v1767 = vmax.f32 %v1731, -1e+30
    %v1768 = vmax.f32 %v1740, -1e+30
    %v1769 = vmax.f32 %v1749, -1e+30
    %v1770 = vmax.f32 %v1758, -1e+30
    %v1773 = vrot.slane %v1563, 1
    %v1774 = vrot.slane %v1563, 2
    %v1775 = vrot.slane %v1563, 3
    %v1776 = vrot.slane %v1563, 4
    %v1777 = vrot.slane %v1563, 5
    %v1778 = vrot.slane %v1563, 6
    %v1779 = vrot.slane %v1563, 7
    %v1780 = vrot.slane %v1566, 1
    %v1781 = vrot.slane %v1566, 2
    %v1782 = vrot.slane %v1566, 3
    %v1795 = vsub.f32 %v1759, %v1563
    %v1796 = vsub.f32 %v1760, %v1773
    %v1797 = vsub.f32 %v1761, %v1774
    %v1798 = vsub.f32 %v1762, %v1775
    %v1799 = vsub.f32 %v1763, %v1776
    %v1800 = vsub.f32 %v1764, %v1777
    %v1801 = vsub.f32 %v1765, %v1778
    %v1802 = vsub.f32 %v1766, %v1779
    %v1803 = vsub.f32 %v1767, %v1566
    %v1804 = vsub.f32 %v1768, %v1780
    %v1805 = vsub.f32 %v1769, %v1781
    %v1806 = vsub.f32 %v1770, %v1782
    %v1809 = vrot.slane %v1621, 1
    %v1810 = vrot.slane %v1621, 2
    %v1811 = vrot.slane %v1621, 3
    %v1812 = vrot.slane %v1621, 4
    %v1813 = vrot.slane %v1621, 5
    %v1814 = vrot.slane %v1621, 6
    %v1815 = vrot.slane %v1621, 7
    %v1816 = vrot.slane %v1624, 1
    %v1817 = vrot.slane %v1624, 2
    %v1818 = vrot.slane %v1624, 3
    %v1831 = vadd.f32 %v1795, %v1621
    %v1832 = vadd.f32 %v1796, %v1809
    %v1833 = vadd.f32 %v1797, %v1810
    %v1834 = vadd.f32 %v1798, %v1811
    %v1835 = vadd.f32 %v1799, %v1812
    %v1836 = vadd.f32 %v1800, %v1813
    %v1837 = vadd.f32 %v1801, %v1814
    %v1838 = vadd.f32 %v1802, %v1815
    %v1839 = vadd.f32 %v1803, %v1624
    %v1840 = vadd.f32 %v1804, %v1816
    %v1841 = vadd.f32 %v1805, %v1817
    %v1842 = vadd.f32 %v1806, %v1818
    %s1843 = scalar_lea.vmem %s4, 3
    %v1844 = vld [vmem:[%s1843] sm:$0x1]
    %v1846 = vlaneseq
    %v1847 = vshrl.u32 %v1846, 7
    %v1848 = vsub.s32 0, %v1847
    %v1849 = vrot.slane %v1844, %v1848
    %v1851 = vadd.f32 %v1831, %v1849
    %v1852 = vadd.f32 %v1832, %v1849
    %v1853 = vadd.f32 %v1833, %v1849
    %v1854 = vadd.f32 %v1834, %v1849
    %v1855 = vadd.f32 %v1835, %v1849
    %v1856 = vadd.f32 %v1836, %v1849
    %v1857 = vadd.f32 %v1837, %v1849
    %v1858 = vadd.f32 %v1838, %v1849
    %v1859 = vadd.f32 %v1839, %v1849
    %v1860 = vadd.f32 %v1840, %v1849
    %v1861 = vadd.f32 %v1841, %v1849
    %v1862 = vadd.f32 %v1842, %v1849
    %v1863 = vmax.f32 %v1851, 0.0
    %v1864 = vmax.f32 %v1852, 0.0
    %v1865 = vmax.f32 %v1853, 0.0
    %v1866 = vmax.f32 %v1854, 0.0
    %v1867 = vmax.f32 %v1855, 0.0
    %v1868 = vmax.f32 %v1856, 0.0
    %v1869 = vmax.f32 %v1857, 0.0
    %v1870 = vmax.f32 %v1858, 0.0
    %v1871 = vmax.f32 %v1859, 0.0
    %v1872 = vmax.f32 %v1860, 0.0
    %v1873 = vmax.f32 %v1861, 0.0
    %v1874 = vmax.f32 %v1862, 0.0
    %v1875 = vpack.c.bf16 %v1871, %v1871
    %v1876 = vpack.c.bf16 %v1872, %v1872
    %v1877 = vpack.c.bf16 %v1873, %v1873
    %v1878 = vpack.c.bf16 %v1874, %v1874
    %v1879 = vld [vmem:[%s5] sm:$0xf]
    %v1880 = vld [vmem:[%s5 + $0x4] sm:$0xf]
    %v1881 = vld [vmem:[%s5 + $0x8] sm:$0xf]
    %v1882 = vld [vmem:[%s5 + $0xc] sm:$0xf]
    %v1887 = vunpack.c.l.b16 %v1875
    %v1888 = vunpack.c.l.b16 %v1876
    %v1889 = vunpack.c.l.b16 %v1877
    %v1890 = vunpack.c.l.b16 %v1878
    %v1891 = vrot.slane %v1888, 7
    %v1892 = vsel %vm638, %v1891, %v1887
    %v1893 = vrot.slane %v1889, 6
    %v1894 = vsel %vm641, %v1893, %v1892
    %v1895 = vrot.slane %v1890, 5
    %v1896 = vsel %vm644, %v1895, %v1894
    %v1897 = vpack.c.b16 %v1896, %v1896
    %v1902 = vunpack.c.l.b16 %v1879
    %v1903 = vunpack.c.l.b16 %v1880
    %v1904 = vunpack.c.l.b16 %v1881
    %v1905 = vunpack.c.l.b16 %v1882
    %v1906 = vpack.c.b16 %v1903, %v1902
    %v1907 = vpack.c.b16 %v1905, %v1904
    %v1911 = vsel %vm114, %v1897, 0
    %1913 = vmatprep.subr.bf16.mxu0 0
    %1914 = vmatpush1.bf16.msra.mxu0 %v1906
    %1915 = vmatprep.subr.bf16.mxu0 0
    %1916 = vmatpush1.bf16.msra.mxu0 %v1907
    %1917 = vmatprep.subr.bf16.mxu0 0
    %1918 = vmatpush1.bf16.msra.mxu0 0
    %1919 = vmatprep.subr.bf16.mxu0 0
    %1920 = vmatpush1.bf16.msra.mxu0 0
    %1921 = vmatprep.subr.bf16.mxu0 0
    %1922 = vmatpush1.bf16.msra.mxu0 0
    %1923 = vmatprep.subr.bf16.mxu0 0
    %1924 = vmatpush1.bf16.msra.mxu0 0
    %1925 = vmatprep.subr.bf16.mxu0 0
    %1926 = vmatpush1.bf16.msra.mxu0 0
    %1927 = vmatprep.subr.bf16.mxu0 0
    %1928 = vmatpush1.bf16.msra.mxu0 0
    %1929 = vmatprep.subr.bf16.mxu0 0
    %1930 = vmatpush1.bf16.msra.mxu0 0
    %1931 = vmatprep.subr.bf16.mxu0 0
    %1932 = vmatpush1.bf16.msra.mxu0 0
    %1933 = vmatprep.subr.bf16.mxu0 0
    %1934 = vmatpush1.bf16.msra.mxu0 0
    %1935 = vmatprep.subr.bf16.mxu0 0
    %1936 = vmatpush1.bf16.msra.mxu0 0
    %1937 = vmatprep.subr.bf16.mxu0 0
    %1938 = vmatpush1.bf16.msra.mxu0 0
    %1939 = vmatprep.subr.bf16.mxu0 0
    %1940 = vmatpush1.bf16.msra.mxu0 0
    %1941 = vmatprep.subr.bf16.mxu0 0
    %1942 = vmatpush1.bf16.msra.mxu0 0
    %1943 = vmatprep.subr.bf16.mxu0 0
    %1944 = vmatpush1.bf16.msra.mxu0 0
    %1945 = vmatprep.mubr.bf16.mxu0 0
    %1946 = vmatmul.mubr.bf16.gmra.mrb[0].mxu0 %v1911
    %v1947 = vpop.f32.mrb[0].mxu0
    %v1948 = vadd.f32 0.0, %v1947
    %v1949 = vpop.f32.mrb[0].mxu0
    %v1950 = vpop.f32.mrb[0].mxu0
    %v1951 = vpop.f32.mrb[0].mxu0
    %1952 = vdwg.mxu0
    %v1953 = vpack.c.bf16 %v1863, %v1863
    %v1954 = vpack.c.bf16 %v1864, %v1864
    %v1955 = vpack.c.bf16 %v1865, %v1865
    %v1956 = vpack.c.bf16 %v1866, %v1866
    %v1957 = vpack.c.bf16 %v1867, %v1867
    %v1958 = vpack.c.bf16 %v1868, %v1868
    %v1959 = vpack.c.bf16 %v1869, %v1869
    %v1960 = vpack.c.bf16 %v1870, %v1870
    %v1969 = vunpack.c.l.b16 %v1953
    %v1970 = vunpack.c.l.b16 %v1954
    %v1971 = vunpack.c.l.b16 %v1955
    %v1972 = vunpack.c.l.b16 %v1956
    %v1973 = vunpack.c.l.b16 %v1957
    %v1974 = vunpack.c.l.b16 %v1958
    %v1975 = vunpack.c.l.b16 %v1959
    %v1976 = vunpack.c.l.b16 %v1960
    %v1977 = vrot.slane %v1970, 7
    %v1978 = vsel %vm638, %v1977, %v1969
    %v1979 = vrot.slane %v1971, 6
    %v1980 = vsel %vm641, %v1979, %v1978
    %v1981 = vrot.slane %v1972, 5
    %v1982 = vsel %vm644, %v1981, %v1980
    %v1983 = vrot.slane %v1973, 4
    %v1984 = vsel %vm647, %v1983, %v1982
    %v1985 = vrot.slane %v1974, 3
    %v1986 = vsel %vm650, %v1985, %v1984
    %v1987 = vrot.slane %v1975, 2
    %v1988 = vsel %vm653, %v1987, %v1986
    %v1989 = vrot.slane %v1976, 1
    %v1990 = vsel %vm656, %v1989, %v1988
    %v1991 = vpack.c.b16 %v1990, %v1990
    %v1993 = vsel %vm114, %v1991, 0
    %1995 = vmatprep.subr.bf16.mxu0 0
    %1996 = vmatpush1.bf16.msra.mxu0 %v1906
    %1997 = vmatprep.subr.bf16.mxu0 0
    %1998 = vmatpush1.bf16.msra.mxu0 %v1907
    %1999 = vmatprep.subr.bf16.mxu0 0
    %2000 = vmatpush1.bf16.msra.mxu0 0
    %2001 = vmatprep.subr.bf16.mxu0 0
    %2002 = vmatpush1.bf16.msra.mxu0 0
    %2003 = vmatprep.subr.bf16.mxu0 0
    %2004 = vmatpush1.bf16.msra.mxu0 0
    %2005 = vmatprep.subr.bf16.mxu0 0
    %2006 = vmatpush1.bf16.msra.mxu0 0
    %2007 = vmatprep.subr.bf16.mxu0 0
    %2008 = vmatpush1.bf16.msra.mxu0 0
    %2009 = vmatprep.subr.bf16.mxu0 0
    %2010 = vmatpush1.bf16.msra.mxu0 0
    %2011 = vmatprep.subr.bf16.mxu0 0
    %2012 = vmatpush1.bf16.msra.mxu0 0
    %2013 = vmatprep.subr.bf16.mxu0 0
    %2014 = vmatpush1.bf16.msra.mxu0 0
    %2015 = vmatprep.subr.bf16.mxu0 0
    %2016 = vmatpush1.bf16.msra.mxu0 0
    %2017 = vmatprep.subr.bf16.mxu0 0
    %2018 = vmatpush1.bf16.msra.mxu0 0
    %2019 = vmatprep.subr.bf16.mxu0 0
    %2020 = vmatpush1.bf16.msra.mxu0 0
    %2021 = vmatprep.subr.bf16.mxu0 0
    %2022 = vmatpush1.bf16.msra.mxu0 0
    %2023 = vmatprep.subr.bf16.mxu0 0
    %2024 = vmatpush1.bf16.msra.mxu0 0
    %2025 = vmatprep.subr.bf16.mxu0 0
    %2026 = vmatpush1.bf16.msra.mxu0 0
    %2027 = vmatprep.mubr.bf16.mxu0 0
    %2028 = vmatmul.mubr.bf16.gmra.mrb[0].mxu0 %v1993
    %v2029 = vpop.f32.mrb[0].mxu0
    %v2030 = vadd.f32 0.0, %v2029
    %v2031 = vpop.f32.mrb[0].mxu0
    %v2032 = vpop.f32.mrb[0].mxu0
    %v2033 = vpop.f32.mrb[0].mxu0
    %2034 = vdwg.mxu0
    %v2036 = vcombine.high %v2030, %v2030
    %v2038 = vunpack.c.l.s4 1966171168
    %v2039 = vunpack.c.0.s8 %v2038
    %v2040 = vlaneseq
    %v2041 = vshrl.u32 %v2040, 7
    %v2042 = vsub.s32 %v2039, %v2041
    %v2043 = vrot.slane %v2030, %v2042
    %v2045 = vunpack.c.l.s4 1966171168
    %v2046 = vunpack.c.0.s8 %v2045
    %v2047 = vlaneseq
    %v2048 = vshrl.u32 %v2047, 7
    %v2049 = vsub.s32 %v2046, %v2048
    %v2050 = vrot.slane %v2036, %v2049
    %v2051 = vcombine.high %v2043, %v2043
    %v2052 = vcombine.high %v2050, %v2050
    %v2054 = vunpack.c.l.s4 1966171168
    %v2055 = vunpack.c.0.s8 %v2054
    %v2056 = vlaneseq
    %v2057 = vshrl.u32 %v2056, 7
    %v2058 = vsub.s32 %v2055, %v2057
    %v2059 = vrot.slane %v2043, %v2058
    %v2061 = vunpack.c.l.s4 1966171168
    %v2062 = vunpack.c.0.s8 %v2061
    %v2063 = vlaneseq
    %v2064 = vshrl.u32 %v2063, 7
    %v2065 = vsub.s32 %v2062, %v2064
    %v2066 = vrot.slane %v2050, %v2065
    %v2068 = vunpack.c.l.s4 1966171168
    %v2069 = vunpack.c.0.s8 %v2068
    %v2070 = vlaneseq
    %v2071 = vshrl.u32 %v2070, 7
    %v2072 = vsub.s32 %v2069, %v2071
    %v2073 = vrot.slane %v2051, %v2072
    %v2075 = vunpack.c.l.s4 1966171168
    %v2076 = vunpack.c.0.s8 %v2075
    %v2077 = vlaneseq
    %v2078 = vshrl.u32 %v2077, 7
    %v2079 = vsub.s32 %v2076, %v2078
    %v2080 = vrot.slane %v2052, %v2079
    %v2081 = vcombine.high %v2059, %v2059
    %v2082 = vcombine.high %v2066, %v2066
    %v2083 = vcombine.high %v2073, %v2073
    %v2084 = vcombine.high %v2080, %v2080
    %v2085 = vlaneseq
    %v2086 = vshrl.u32 %v2085, 7
    %v2087 = vsub.s32 0, %v2086
    %v2088 = vrot.slane %v2059, %v2087
    %v2089 = vlaneseq
    %v2090 = vshrl.u32 %v2089, 7
    %v2091 = vsub.s32 0, %v2090
    %v2092 = vrot.slane %v2073, %v2091
    %v2093 = vlaneseq
    %v2094 = vshrl.u32 %v2093, 7
    %v2095 = vsub.s32 0, %v2094
    %v2096 = vrot.slane %v2081, %v2095
    %v2097 = vlaneseq
    %v2098 = vshrl.u32 %v2097, 7
    %v2099 = vsub.s32 0, %v2098
    %v2100 = vrot.slane %v2083, %v2099
    %v2101 = vlaneseq
    %v2102 = vshrl.u32 %v2101, 7
    %v2103 = vsub.s32 0, %v2102
    %v2104 = vrot.slane %v2066, %v2103
    %v2105 = vlaneseq
    %v2106 = vshrl.u32 %v2105, 7
    %v2107 = vsub.s32 0, %v2106
    %v2108 = vrot.slane %v2080, %v2107
    %v2109 = vlaneseq
    %v2110 = vshrl.u32 %v2109, 7
    %v2111 = vsub.s32 0, %v2110
    %v2112 = vrot.slane %v2082, %v2111
    %v2113 = vlaneseq
    %v2114 = vshrl.u32 %v2113, 7
    %v2115 = vsub.s32 0, %v2114
    %v2116 = vrot.slane %v2084, %v2115
    %v2125 = vsub.f32 %v1948, %v2088
    %v2126 = vsub.f32 %v1948, %v2092
    %v2127 = vsub.f32 %v1948, %v2096
    %v2128 = vsub.f32 %v1948, %v2100
    %v2129 = vsub.f32 %v1948, %v2104
    %v2130 = vsub.f32 %v1948, %v2108
    %v2131 = vsub.f32 %v1948, %v2112
    %v2132 = vsub.f32 %v1948, %v2116
    %v2133 = vld [vmem:[%s6] sm:$0x1]
    %v2135 = vlaneseq
    %v2136 = vshrl.u32 %v2135, 7
    %v2137 = vsub.s32 0, %v2136
    %v2138 = vrot.slane %v2133, %v2137
    %v2140 = vadd.f32 %v2125, %v2138
    %v2141 = vadd.f32 %v2126, %v2138
    %v2142 = vadd.f32 %v2127, %v2138
    %v2143 = vadd.f32 %v2128, %v2138
    %v2144 = vadd.f32 %v2129, %v2138
    %v2145 = vadd.f32 %v2130, %v2138
    %v2146 = vadd.f32 %v2131, %v2138
    %v2147 = vadd.f32 %v2132, %v2138
    %v2148 = vmax.f32 %v2140, 0.0
    %v2149 = vmax.f32 %v2141, 0.0
    %v2150 = vmax.f32 %v2142, 0.0
    %v2151 = vmax.f32 %v2143, 0.0
    %v2152 = vmax.f32 %v2144, 0.0
    %v2153 = vmax.f32 %v2145, 0.0
    %v2154 = vmax.f32 %v2146, 0.0
    %v2155 = vmax.f32 %v2147, 0.0
    %v2156 = vld [vmem:[%s7] sm:$0x1]
    %v2158 = vlaneseq
    %v2159 = vshrl.u32 %v2158, 7
    %v2160 = vsub.s32 0, %v2159
    %v2161 = vrot.slane %v2156, %v2160
    %v2163 = vmul.f32 %v2148, %v2161
    %v2164 = vmul.f32 %v2149, %v2161
    %v2165 = vmul.f32 %v2150, %v2161
    %v2166 = vmul.f32 %v2151, %v2161
    %v2167 = vmul.f32 %v2152, %v2161
    %v2168 = vmul.f32 %v2153, %v2161
    %v2169 = vmul.f32 %v2154, %v2161
    %v2170 = vmul.f32 %v2155, %v2161
    %v2171 = vsel %vm373, %v2163, 0.0
    %2172 = vadd.xlane.f32.xlu0 %v2171
    %v2173 = vpop.xlane.xlu0 %2172
    %v2174 = vsel %vm373, %v2164, 0.0
    %2175 = vadd.xlane.f32.xlu0 %v2174
    %v2176 = vpop.xlane.xlu0 %2175
    %v2177 = vsel %vm373, %v2165, 0.0
    %2178 = vadd.xlane.f32.xlu0 %v2177
    %v2179 = vpop.xlane.xlu0 %2178
    %v2180 = vsel %vm373, %v2166, 0.0
    %2181 = vadd.xlane.f32.xlu0 %v2180
    %v2182 = vpop.xlane.xlu0 %2181
    %v2183 = vsel %vm373, %v2167, 0.0
    %2184 = vadd.xlane.f32.xlu0 %v2183
    %v2185 = vpop.xlane.xlu0 %2184
    %v2186 = vsel %vm373, %v2168, 0.0
    %2187 = vadd.xlane.f32.xlu0 %v2186
    %v2188 = vpop.xlane.xlu0 %2187
    %v2189 = vsel %vm373, %v2169, 0.0
    %2190 = vadd.xlane.f32.xlu0 %v2189
    %v2191 = vpop.xlane.xlu0 %2190
    %v2192 = vsel %vm373, %v2170, 0.0
    %2193 = vadd.xlane.f32.xlu0 %v2192
    %v2194 = vpop.xlane.xlu0 %2193
    %s2195 = sld [smem:[#allocation2]]
    %v2196 = vstv %s2195
    %v2197 = vadd.f32 %v2173, %v2196
    %v2198 = vadd.f32 %v2176, %v2196
    %v2199 = vadd.f32 %v2179, %v2196
    %v2200 = vadd.f32 %v2182, %v2196
    %v2201 = vadd.f32 %v2185, %v2196
    %v2202 = vadd.f32 %v2188, %v2196
    %v2203 = vadd.f32 %v2191, %v2196
    %v2204 = vadd.f32 %v2194, %v2196
    %v2213 = vlaneseq
    %v2214 = vand.u32 %v2213, 127
    %v2215 = vlaneseq
    %v2216 = vshrl.u32 %v2215, 7
    %v2217 = vsub.s32 %v2214, %v2216
    %v2218 = vrot.slane %v2197, %v2217
    %v2219 = vlaneseq
    %v2220 = vshrl.u32 %v2219, 7
    %v2221 = vsub.s32 %v2214, %v2220
    %v2222 = vrot.slane %v2198, %v2221
    %v2223 = vlaneseq
    %v2224 = vshrl.u32 %v2223, 7
    %v2225 = vsub.s32 %v2214, %v2224
    %v2226 = vrot.slane %v2199, %v2225
    %v2227 = vlaneseq
    %v2228 = vshrl.u32 %v2227, 7
    %v2229 = vsub.s32 %v2214, %v2228
    %v2230 = vrot.slane %v2200, %v2229
    %v2231 = vlaneseq
    %v2232 = vshrl.u32 %v2231, 7
    %v2233 = vsub.s32 %v2214, %v2232
    %v2234 = vrot.slane %v2201, %v2233
    %v2235 = vlaneseq
    %v2236 = vshrl.u32 %v2235, 7
    %v2237 = vsub.s32 %v2214, %v2236
    %v2238 = vrot.slane %v2202, %v2237
    %v2239 = vlaneseq
    %v2240 = vshrl.u32 %v2239, 7
    %v2241 = vsub.s32 %v2214, %v2240
    %v2242 = vrot.slane %v2203, %v2241
    %v2243 = vlaneseq
    %v2244 = vshrl.u32 %v2243, 7
    %v2245 = vsub.s32 %v2214, %v2244
    %v2246 = vrot.slane %v2204, %v2245
    %v2247 = vsel %vm638, %v2222, %v2218
    %v2248 = vsel %vm641, %v2226, %v2247
    %v2249 = vsel %vm644, %v2230, %v2248
    %v2250 = vsel %vm647, %v2234, %v2249
    %v2251 = vsel %vm650, %v2238, %v2250
    %v2252 = vsel %vm653, %v2242, %v2251
    %v2253 = vsel %vm656, %v2246, %v2252
    %vm2255 = vcmask 31744
    %v2256 = vsel %vm2255, %v2253, 0.0
    %2257 = vst [vmem:[%s9] sm:$0xff] %v2256
    // Predicated region
    $region54: #{edge_conv_forward.1} parent=1 // pred_check
      _
    $region55: #{edge_conv_forward.1} parent=1 // pred_check_branch
      %2259 = sbr.rel (0) target = $region57
    $region56: #{edge_conv_forward.1} parent=1 // pred_region
      _
    $region57: #{edge_conv_forward.1} parent=1 // pred_fallthru
      _
    // Predicated region
    $region58: #{edge_conv_forward.1} parent=1 // pred_check
      _
    $region59: #{edge_conv_forward.1} parent=1 // pred_check_branch
      %2261 = sbr.rel (0) target = $region61
    $region60: #{edge_conv_forward.1} parent=1 // pred_region
      _
    $region61: #{edge_conv_forward.1} parent=1 // pred_fallthru
      _
    %2262 = vsyncpa [#allocation4], 1
    %2263 = vsyncpa [#allocation6], 1
    %2264 = vsyncpa [#allocation9], 1

</llo_original>
